<compile_context>
chip_gen: v6e
topology: v6e:2x2x1
jax: 0.10.0
libtpu: 0.0.40
codegen_flags: <defaults>
</compile_context>

<pallas_src>
import math
from functools import partial

import jax
import jax.numpy as jnp
from jax.experimental import pallas as pl
from jax.experimental.pallas import tpu as pltpu

EPS = 1e-6
_VMEM_LIMIT = 32 * 1024 * 1024  # >= default scoped VMEM on v5e, safe on v6e/v7x


def find_multiple(n: int, k: int) -> int:
    if n % k == 0:
        return n
    return n + k - n % k


def _blk(dim: int, target: int) -> int:
    """Largest 'nice' tile <= target that divides dim (fallback: full dim)."""
    if dim <= target:
        return dim
    for c in (target, target // 2, target // 4, 256, 128, 64, 32, 16, 8):
        if 0 < c <= dim and dim % c == 0:
            return c
    return dim


# --------------------- Kernel A: fused RMSNorm + matmul ----------------------

def _norm_matmul_kernel(x_ref, g_ref, w_ref, o_ref):
    x = x_ref[...].astype(jnp.float32)
    inv = jax.lax.rsqrt(jnp.mean(x * x, axis=-1, keepdims=True) + EPS)
    h = (x * inv * g_ref[...]).astype(jnp.bfloat16)
    o_ref[...] = jnp.dot(h, w_ref[...],
                         preferred_element_type=jnp.float32).astype(o_ref.dtype)


def rmsnorm_matmul(x2d, gamma, w_bf16, *, bm=256, bn=512, out_dtype=jnp.bfloat16):
    M, C = x2d.shape
    _, N = w_bf16.shape
    tm, tn = _blk(M, bm), _blk(N, bn)
    return pl.pallas_call(
        _norm_matmul_kernel,
        out_shape=jax.ShapeDtypeStruct((M, N), out_dtype),
        grid=(M // tm, N // tn),
        in_specs=[pl.BlockSpec((tm, C), lambda i, j: (i, 0)),
                  pl.BlockSpec((1, C), lambda i, j: (0, 0)),
                  pl.BlockSpec((C, tn), lambda i, j: (0, j))],
        out_specs=pl.BlockSpec((tm, tn), lambda i, j: (i, j)),
        compiler_params=pltpu.CompilerParams(
            dimension_semantics=("parallel", "parallel"),
            vmem_limit_bytes=_VMEM_LIMIT),
    )(x2d, gamma.reshape(1, C).astype(jnp.float32), w_bf16)


# ------------- Kernel B: flash attention (RoPE + causal in-kernel) -----------

def _flash_kernel(q_ref, k_ref, v_ref, cq_ref, sq_ref, ck_ref, sk_ref, o_ref,
                  m_sc, l_sc, acc_sc, *, scale, t_q, t_kv):
    ki = pl.program_id(3)
    q_start = pl.program_id(2) * t_q
    k_start = ki * t_kv

    @pl.when(ki == 0)
    def _():
        m_sc[...] = jnp.full_like(m_sc, -jnp.inf)
        l_sc[...] = jnp.zeros_like(l_sc)
        acc_sc[...] = jnp.zeros_like(acc_sc)

    # skip kv tiles that are entirely above the causal diagonal
    @pl.when(k_start <= q_start + (t_q - 1))
    def _():
        hd = q_ref.shape[-1]
        hd2 = hd // 2
        qf = q_ref[0, 0].astype(jnp.float32)
        kf = k_ref[0, 0].astype(jnp.float32)
        cq, sq = cq_ref[...], sq_ref[...]
        ck, sk = ck_ref[...], sk_ref[...]
        qa, qb = qf[:, :hd2], qf[:, hd2:]
        ka, kb = kf[:, :hd2], kf[:, hd2:]
        # rotate-half RoPE (q/k weight columns were de-interleaved in the
        # wrapper, so this matches the reference interleaved RoPE exactly).
        qra = (qa * cq - qb * sq).astype(jnp.bfloat16)
        qrb = (qb * cq + qa * sq).astype(jnp.bfloat16)
        kra = (ka * ck - kb * sk).astype(jnp.bfloat16)
        krb = (kb * ck + ka * sk).astype(jnp.bfloat16)
        dn = (((1,), (1,)), ((), ()))
        s = (jax.lax.dot_general(qra, kra, dn, preferred_element_type=jnp.float32)
             + jax.lax.dot_general(qrb, krb, dn, preferred_element_type=jnp.float32))
        s = s * scale
        row = q_start + jax.lax.broadcasted_iota(jnp.int32, s.shape, 0)
        col = k_start + jax.lax.broadcasted_iota(jnp.int32, s.shape, 1)
        s = jnp.where(row >= col, s, -1e30)

        m_prev = m_sc[...]
        m_new = jnp.maximum(m_prev, jnp.max(s, axis=-1, keepdims=True))
        alpha = jnp.exp(m_prev - m_new)
        p = jnp.exp(s - m_new)
        l_sc[...] = alpha * l_sc[...] + jnp.sum(p, axis=-1, keepdims=True)
        acc_sc[...] = alpha * acc_sc[...] + jnp.dot(
            p.astype(jnp.bfloat16), v_ref[0, 0],
            preferred_element_type=jnp.float32)
        m_sc[...] = m_new

    @pl.when(ki == pl.num_programs(3) - 1)
    def _():
        o_ref[0, 0] = (acc_sc[...] *
                       pl.reciprocal(l_sc[...], approx=True)).astype(o_ref.dtype)


def flash_attention(q, k, v, cos, sin, *, bq=256, bkv=256):
    # q, k, v: (B, H, T, hd) bf16;  cos, sin: (T, hd//2) f32
    B, H, T, hd = q.shape
    hd2 = hd // 2
    tq, tkv = _blk(T, bq), _blk(T, bkv)
    scale = 1.0 / math.sqrt(hd)
    return pl.pallas_call(
        partial(_flash_kernel, scale=scale, t_q=tq, t_kv=tkv),
        out_shape=jax.ShapeDtypeStruct((B, H, T, hd), jnp.bfloat16),
        grid=(B, H, T // tq, T // tkv),
        in_specs=[
            pl.BlockSpec((1, 1, tq, hd), lambda b, h, qi, ki: (b, h, qi, 0)),
            pl.BlockSpec((1, 1, tkv, hd), lambda b, h, qi, ki: (b, h, ki, 0)),
            pl.BlockSpec((1, 1, tkv, hd), lambda b, h, qi, ki: (b, h, ki, 0)),
            pl.BlockSpec((tq, hd2), lambda b, h, qi, ki: (qi, 0)),   # cos for q
            pl.BlockSpec((tq, hd2), lambda b, h, qi, ki: (qi, 0)),   # sin for q
            pl.BlockSpec((tkv, hd2), lambda b, h, qi, ki: (ki, 0)),  # cos for k
            pl.BlockSpec((tkv, hd2), lambda b, h, qi, ki: (ki, 0)),  # sin for k
        ],
        out_specs=pl.BlockSpec((1, 1, tq, hd), lambda b, h, qi, ki: (b, h, qi, 0)),
        scratch_shapes=[pltpu.VMEM((tq, 1), jnp.float32),
                        pltpu.VMEM((tq, 1), jnp.float32),
                        pltpu.VMEM((tq, hd), jnp.float32)],
        compiler_params=pltpu.CompilerParams(
            dimension_semantics=("parallel", "parallel", "parallel", "arbitrary"),
            vmem_limit_bytes=_VMEM_LIMIT),
    )(q, k, v, cos, sin, cos, sin)


# -------------- Kernel C: fused residual + output projection -----------------

def _residual_matmul_kernel(res_ref, y_ref, w_ref, o_ref):
    o_ref[...] = res_ref[...] + jnp.dot(y_ref[...], w_ref[...],
                                        preferred_element_type=jnp.float32)


def residual_matmul(res2d, y2d_bf16, w_bf16, *, bm=256, bn=256):
    M, K = y2d_bf16.shape
    _, N = w_bf16.shape
    tm, tn = _blk(M, bm), _blk(N, bn)
    return pl.pallas_call(
        _residual_matmul_kernel,
        out_shape=jax.ShapeDtypeStruct((M, N), jnp.float32),
        grid=(M // tm, N // tn),
        in_specs=[pl.BlockSpec((tm, tn), lambda i, j: (i, j)),
                  pl.BlockSpec((tm, K), lambda i, j: (i, 0)),
                  pl.BlockSpec((K, tn), lambda i, j: (0, j))],
        out_specs=pl.BlockSpec((tm, tn), lambda i, j: (i, j)),
        compiler_params=pltpu.CompilerParams(
            dimension_semantics=("parallel", "parallel"),
            vmem_limit_bytes=_VMEM_LIMIT),
    )(res2d, y2d_bf16, w_bf16)


# ---- Kernel D: fused RMSNorm + SwiGLU + down-projection + residual add ------

def _mlp_kernel(res_ref, g_ref, w1_ref, w2_ref, w3_ref, o_ref):
    @pl.when(pl.program_id(1) == 0)
    def _():
        o_ref[...] = res_ref[...]          # start accumulator at the residual

    x = res_ref[...].astype(jnp.float32)
    inv = jax.lax.rsqrt(jnp.mean(x * x, axis=-1, keepdims=True) + EPS)
    h = (x * inv * g_ref[...]).astype(jnp.bfloat16)
    a = jnp.dot(h, w1_ref[...], preferred_element_type=jnp.float32)
    b = jnp.dot(h, w2_ref[...], preferred_element_type=jnp.float32)
    gated = (a * jax.nn.sigmoid(a)) * b                      # silu(fc1) * fc2
    o_ref[...] += jnp.dot(gated.astype(jnp.bfloat16), w3_ref[...],
                          preferred_element_type=jnp.float32)


def mlp_block(res2d, gamma, w1_bf16, w2_bf16, w3_bf16, *, bm=128, bh=512):
    M, C = res2d.shape
    _, NH = w1_bf16.shape
    tm, th = _blk(M, bm), _blk(NH, bh)
    return pl.pallas_call(
        _mlp_kernel,
        out_shape=jax.ShapeDtypeStruct((M, C), jnp.float32),
        grid=(M // tm, NH // th),          # hidden dim is the reduction axis
        in_specs=[pl.BlockSpec((tm, C), lambda i, j: (i, 0)),
                  pl.BlockSpec((1, C), lambda i, j: (0, 0)),
                  pl.BlockSpec((C, th), lambda i, j: (0, j)),
                  pl.BlockSpec((C, th), lambda i, j: (0, j)),
                  pl.BlockSpec((th, C), lambda i, j: (j, 0))],
        out_specs=pl.BlockSpec((tm, C), lambda i, j: (i, 0)),
        compiler_params=pltpu.CompilerParams(
            dimension_semantics=("parallel", "arbitrary"),
            vmem_limit_bytes=_VMEM_LIMIT),
    )(res2d, gamma.reshape(1, C).astype(jnp.float32), w1_bf16, w2_bf16, w3_bf16)


# ------------------------------- JAX glue ------------------------------------

def build_rope_cache(seq_len, n_elem, base=10000.0):
    theta = 1.0 / (base ** (jnp.arange(0, n_elem, 2, dtype=jnp.float32) / n_elem))
    seq = jnp.arange(seq_len, dtype=jnp.float32)
    idx_theta = jnp.outer(seq, theta)                        # (T, n_elem//2)
    return jnp.stack([jnp.cos(idx_theta), jnp.sin(idx_theta)], axis=-1)


def init_params(key, n_embd, n_hidden):
    ks = jax.random.split(key, 5)
    s = 0.02
    return {
        "g1": jnp.ones((n_embd,), jnp.float32),
        "g2": jnp.ones((n_embd,), jnp.float32),
        "w_attn": s * jax.random.normal(ks[0], (n_embd, 3 * n_embd), jnp.float32),
        "w_proj": s * jax.random.normal(ks[1], (n_embd, n_embd), jnp.float32),
        "w_fc1": s * jax.random.normal(ks[2], (n_embd, n_hidden), jnp.float32),
        "w_fc2": s * jax.random.normal(ks[3], (n_embd, n_hidden), jnp.float32),
        "w_cproj": s * jax.random.normal(ks[4], (n_hidden, n_embd), jnp.float32),
    }


def prepare_params(params, n_head, n_embd):
    """Cast weights to bf16 and de-interleave the q/k columns of Wqkv so the
    attention kernel can apply rotate-half RoPE (mathematically identical to the
    reference interleaved RoPE because attention scores are invariant under a
    common per-head permutation of q and k)."""
    hd = n_embd // n_head
    within = jnp.concatenate([jnp.arange(0, hd, 2), jnp.arange(1, hd, 2)])
    perm = (jnp.arange(n_head)[:, None] * hd + within[None, :]).reshape(-1)
    cols = jnp.concatenate([perm, n_embd + perm, 2 * n_embd + jnp.arange(n_embd)])
    return {
        "g1": params["g1"].astype(jnp.float32),
        "g2": params["g2"].astype(jnp.float32),
        "w_attn": params["w_attn"][:, cols].astype(jnp.bfloat16),
        "w_proj": params["w_proj"].astype(jnp.bfloat16),
        "w_fc1": params["w_fc1"].astype(jnp.bfloat16),
        "w_fc2": params["w_fc2"].astype(jnp.bfloat16),
        "w_cproj": params["w_cproj"].astype(jnp.bfloat16),
    }


def block_forward(params, x, rope, mask, *, n_head, max_seq_length):
    # `mask` is accepted for parity with the PyTorch module but the causal mask
    # is generated inside the attention kernel (iota row>=col compare).
    # TODO(synk): kv_cache / input_pos decode path (index_copy / roll) not
    # implemented; this mirrors the kv_cache=None training/prefill path.
    del mask, max_seq_length
    B, T, C = x.shape
    H = n_head
    hd = C // H
    M = B * T
    x2 = x.reshape(M, C).astype(jnp.float32)

    # attention branch: fused rmsnorm+QKV -> flash attention (RoPE+causal) -> proj+residual
    qkv = rmsnorm_matmul(x2, params["g1"], params["w_attn"])       # (M, 3C) bf16
    qkv = qkv.reshape(B, T, 3, H, hd).transpose(2, 0, 3, 1, 4)     # (3,B,H,T,hd)
    q, k, v = qkv[0], qkv[1], qkv[2]
    cos = rope[:T, :, 0]
    sin = rope[:T, :, 1]
    y = flash_attention(q, k, v, cos, sin)                         # (B,H,T,hd) bf16
    y2 = y.transpose(0, 2, 1, 3).reshape(M, C)
    x2 = residual_matmul(x2, y2, params["w_proj"])                 # x + y @ Wproj

    # MLP branch: fused rmsnorm + SwiGLU + down-proj + residual
    x2 = mlp_block(x2, params["g2"], params["w_fc1"], params["w_fc2"],
                   params["w_cproj"])
    return x2.reshape(B, T, C), None                               # new_kv_cache


# ------------------------- pure-JAX reference check --------------------------

def apply_rope_ref(x, rope_cache):
    B, T, H, hd = x.shape
    rc = rope_cache[:T].reshape(1, T, 1, hd // 2, 2)
    xs = x.astype(jnp.float32).reshape(B, T, H, hd // 2, 2)
    out0 = xs[..., 0] * rc[..., 0] - xs[..., 1] * rc[..., 1]
    out1 = xs[..., 1] * rc[..., 0] + xs[..., 0] * rc[..., 1]
    return jnp.stack([out0, out1], axis=-1).reshape(B, T, H, hd)


def block_forward_ref(params, x, rope, mask_bool, n_head):
    B, T, C = x.shape
    hd = C // n_head

    def rms(v, g):
        vf = v.astype(jnp.float32)
        return g * (vf * jax.lax.rsqrt(jnp.mean(vf * vf, -1, keepdims=True) + EPS))

    h = rms(x, params["g1"])
    qkv = h @ params["w_attn"]
    q, k, v = jnp.split(qkv, 3, axis=-1)
    q = apply_rope_ref(q.reshape(B, T, n_head, hd), rope).transpose(0, 2, 1, 3)
    k = apply_rope_ref(k.reshape(B, T, n_head, hd), rope).transpose(0, 2, 1, 3)
    v = v.reshape(B, T, n_head, hd).transpose(0, 2, 1, 3)
    s = jnp.einsum("bhqd,bhkd->bhqk", q, k) / math.sqrt(hd)
    s = jnp.where(mask_bool, s, -1e30)
    p = jax.nn.softmax(s, axis=-1)
    y = jnp.einsum("bhqk,bhkd->bhqd", p, v).transpose(0, 2, 1, 3).reshape(B, T, C)
    x = x + y @ params["w_proj"]
    h2 = rms(x, params["g2"])
    a = h2 @ params["w_fc1"]
    g = (a * jax.nn.sigmoid(a)) * (h2 @ params["w_fc2"])
    return x + g @ params["w_cproj"]


if __name__ == "__main__":
    # Small LLaMA-style config
    B, T = 2, 8
    n_embd, n_head = 32, 4
    head_dim = n_embd // n_head
    max_seq_length = 16
    n_hidden = find_multiple(int(2 * (4 * n_embd) / 3), 256)       # = 256

    key = jax.random.PRNGKey(0)
    k_param, k_x = jax.random.split(key)
    params = init_params(k_param, n_embd, n_hidden)
    x = jax.random.normal(k_x, (B, T, n_embd), jnp.float32)
    rope = build_rope_cache(max_seq_length, head_dim)
    mask_bool = jnp.tril(jnp.ones((T, T), dtype=bool))[None, None]  # (1,1,T,T)

    kparams = prepare_params(params, n_head, n_embd)
    fwd = jax.jit(partial(block_forward, n_head=n_head,
                          max_seq_length=max_seq_length))
    out, new_kv_cache = fwd(kparams, x, rope, mask_bool)
    out = jax.block_until_ready(out)

    ref = block_forward_ref(params, x, rope, mask_bool, n_head)
    assert out.shape == (B, T, n_embd)
    err = float(jnp.max(jnp.abs(out - ref)))
    assert err < 2e-3, f"mismatch vs reference: max abs err = {err}"
    print("KERNEL_OK")
</pallas_src>

<mosaic_0001>
module attributes {stable_mosaic.version = 11 : i64} {
  func.func @_norm_matmul_kernel(%arg0: i32, %arg1: i32, %arg2: memref<16x32xf32, #tpu.memory_space<vmem>>, %arg3: memref<1x32xf32, #tpu.memory_space<vmem>>, %arg4: memref<32x96xbf16, #tpu.memory_space<vmem>>, %arg5: memref<16x96xbf16, #tpu.memory_space<vmem>>) attributes {dimension_semantics = [#tpu.dimension_semantics<parallel>, #tpu.dimension_semantics<parallel>], iteration_bounds = array<i64: 1, 1>, scalar_prefetch = 0 : i64, scratch_operands = 0 : i64, tpu.core_type = #tpu.core_type<tc>, window_params = [{transform_indices = @transform_0, window_bounds = array<i64: 16, 32>}, {pipeline_mode = #tpu.pipeline_mode<synchronous>, transform_indices = @transform_1, window_bounds = array<i64: 1, 32>}, {transform_indices = @transform_2, window_bounds = array<i64: 32, 96>}, {transform_indices = @transform_3, window_bounds = array<i64: 16, 96>}]} {
    %c0 = arith.constant 0 : index
    %c0_0 = arith.constant 0 : index
    %0 = vector.load %arg2[%c0, %c0_0] : memref<16x32xf32, #tpu.memory_space<vmem>>, vector<16x32xf32>
    %1 = arith.mulf %0, %0 : vector<16x32xf32>
    %cst = arith.constant dense<0.000000e+00> : vector<16xf32>
    %2 = vector.multi_reduction <add>, %1, %cst [1] : vector<16x32xf32> to vector<16xf32>
    %3 = vector.shape_cast %2 : vector<16xf32> to vector<16x1xf32>
    %cst_1 = arith.constant 3.200000e+01 : f32
    %4 = vector.broadcast %cst_1 : f32 to vector<16x1xf32>
    %5 = arith.divf %3, %4 : vector<16x1xf32>
    %cst_2 = arith.constant 9.99999997E-7 : f32
    %6 = vector.broadcast %cst_2 : f32 to vector<16x1xf32>
    %7 = arith.addf %5, %6 : vector<16x1xf32>
    %8 = math.rsqrt %7 : vector<16x1xf32>
    %9 = vector.broadcast %8 : vector<16x1xf32> to vector<16x32xf32>
    %10 = arith.mulf %0, %9 : vector<16x32xf32>
    %c0_3 = arith.constant 0 : index
    %c0_4 = arith.constant 0 : index
    %11 = vector.load %arg3[%c0_3, %c0_4] : memref<1x32xf32, #tpu.memory_space<vmem>>, vector<1x32xf32>
    %12 = vector.broadcast %11 : vector<1x32xf32> to vector<16x32xf32>
    %13 = arith.mulf %10, %12 : vector<16x32xf32>
    %14 = arith.truncf %13 : vector<16x32xf32> to vector<16x32xbf16>
    %c0_5 = arith.constant 0 : index
    %c0_6 = arith.constant 0 : index
    %15 = vector.load %arg4[%c0_5, %c0_6] : memref<32x96xbf16, #tpu.memory_space<vmem>>, vector<32x96xbf16>
    %cst_7 = arith.constant dense<0.000000e+00> : vector<16x96xf32>
    %16 = tpu.matmul %14, %15, %cst_7 {dimension_numbers = #tpu.dot_dimension_numbers<[1], [0], [0], [1], [0, 0, 1, 1], [], []>} : vector<16x32xbf16>, vector<32x96xbf16>, vector<16x96xf32> -> vector<16x96xf32>
    %17 = arith.truncf %16 : vector<16x96xf32> to vector<16x96xbf16>
    %c0_8 = arith.constant 0 : index
    %c0_9 = arith.constant 0 : index
    %18 = vector.load %arg5[%c0_8, %c0_9] : memref<16x96xbf16, #tpu.memory_space<vmem>>, vector<16x96xbf16>
    tpu.vector_store %arg5[%c0_8, %c0_9], %17 {strides = array<i32>} : memref<16x96xbf16, #tpu.memory_space<vmem>>, vector<16x96xbf16>,
    return
  }
  func.func @transform_0(%arg0: i32, %arg1: i32) -> (i32, i32) {
    %c0_i32 = arith.constant 0 : i32
    %c0_i32_0 = arith.constant 0 : i32
    return %arg0, %c0_i32 : i32, i32
  }
  func.func @transform_1(%arg0: i32, %arg1: i32) -> (i32, i32) {
    %c0_i32 = arith.constant 0 : i32
    %c0_i32_0 = arith.constant 0 : i32
    %c0_i32_1 = arith.constant 0 : i32
    return %c0_i32, %c0_i32_0 : i32, i32
  }
  func.func @transform_2(%arg0: i32, %arg1: i32) -> (i32, i32) {
    %c0_i32 = arith.constant 0 : i32
    %c0_i32_0 = arith.constant 0 : i32
    return %c0_i32, %arg1 : i32, i32
  }
  func.func @transform_3(%arg0: i32, %arg1: i32) -> (i32, i32) {
    %c0_i32 = arith.constant 0 : i32
    return %arg0, %arg1 : i32, i32
  }
}

module attributes {stable_mosaic.version = 11 : i64} {
  func.func @_flash_kernel(%arg0: i32, %arg1: i32, %arg2: i32, %arg3: i32, %arg4: memref<1x1x8x8xbf16, #tpu.memory_space<vmem>>, %arg5: memref<1x1x8x8xbf16, #tpu.memory_space<vmem>>, %arg6: memref<1x1x8x8xbf16, #tpu.memory_space<vmem>>, %arg7: memref<8x4xf32, #tpu.memory_space<vmem>>, %arg8: memref<8x4xf32, #tpu.memory_space<vmem>>, %arg9: memref<8x4xf32, #tpu.memory_space<vmem>>, %arg10: memref<8x4xf32, #tpu.memory_space<vmem>>, %arg11: memref<1x1x8x8xbf16, #tpu.memory_space<vmem>>, %arg12: memref<8x1xf32, #tpu.memory_space<vmem>>, %arg13: memref<8x1xf32, #tpu.memory_space<vmem>>, %arg14: memref<8x8xf32, #tpu.memory_space<vmem>>) attributes {dimension_semantics = [#tpu.dimension_semantics<parallel>, #tpu.dimension_semantics<parallel>, #tpu.dimension_semantics<parallel>, #tpu.dimension_semantics<arbitrary>], iteration_bounds = array<i64: 2, 4, 1, 1>, scalar_prefetch = 0 : i64, scratch_operands = 3 : i64, tpu.core_type = #tpu.core_type<tc>, window_params = [{transform_indices = @transform_0, window_bounds = array<i64: 1, 1, 8, 8>}, {transform_indices = @transform_1, window_bounds = array<i64: 1, 1, 8, 8>}, {transform_indices = @transform_2, window_bounds = array<i64: 1, 1, 8, 8>}, {transform_indices = @transform_3, window_bounds = array<i64: 8, 4>}, {transform_indices = @transform_4, window_bounds = array<i64: 8, 4>}, {transform_indices = @transform_5, window_bounds = array<i64: 8, 4>}, {transform_indices = @transform_6, window_bounds = array<i64: 8, 4>}, {transform_indices = @transform_7, window_bounds = array<i64: 1, 1, 8, 8>}]} {
    %c8_i32 = arith.constant 8 : i32
    %0 = arith.muli %arg2, %c8_i32 : i32
    %c8_i32_0 = arith.constant 8 : i32
    %1 = arith.muli %arg3, %c8_i32_0 : i32
    %c0_i32 = arith.constant 0 : i32
    %2 = arith.cmpi eq, %arg3, %c0_i32 : i32
    %3 = arith.extui %2 : i1 to i32
    %c0_i32_1 = arith.constant 0 : i32
    %4 = arith.cmpi ne, %3, %c0_i32_1 : i32
    scf.if %4 {
      %cst = arith.constant 0xFF800000 : f32
      %12 = vector.broadcast %cst : f32 to vector<8x1xf32>
      %c0 = arith.constant 0 : index
      %c0_5 = arith.constant 0 : index
      %13 = vector.load %arg12[%c0, %c0_5] : memref<8x1xf32, #tpu.memory_space<vmem>>, vector<8x1xf32>
      tpu.vector_store %arg12[%c0, %c0_5], %12 {strides = array<i32>} : memref<8x1xf32, #tpu.memory_space<vmem>>, vector<8x1xf32>,
      %cst_6 = arith.constant 0.000000e+00 : f32
      %14 = vector.broadcast %cst_6 : f32 to vector<8x1xf32>
      %c0_7 = arith.constant 0 : index
      %c0_8 = arith.constant 0 : index
      %15 = vector.load %arg13[%c0_7, %c0_8] : memref<8x1xf32, #tpu.memory_space<vmem>>, vector<8x1xf32>
      tpu.vector_store %arg13[%c0_7, %c0_8], %14 {strides = array<i32>} : memref<8x1xf32, #tpu.memory_space<vmem>>, vector<8x1xf32>,
      %cst_9 = arith.constant 0.000000e+00 : f32
      %16 = vector.broadcast %cst_9 : f32 to vector<8x8xf32>
      %c0_10 = arith.constant 0 : index
      %c0_11 = arith.constant 0 : index
      %17 = vector.load %arg14[%c0_10, %c0_11] : memref<8x8xf32, #tpu.memory_space<vmem>>, vector<8x8xf32>
      tpu.vector_store %arg14[%c0_10, %c0_11], %16 {strides = array<i32>} : memref<8x8xf32, #tpu.memory_space<vmem>>, vector<8x8xf32>,
    } else {
    }
    %c7_i32 = arith.constant 7 : i32
    %5 = arith.addi %0, %c7_i32 : i32
    %6 = arith.cmpi sle, %1, %5 : i32
    %7 = arith.extui %6 : i1 to i32
    %c0_i32_2 = arith.constant 0 : i32
    %8 = arith.cmpi ne, %7, %c0_i32_2 : i32
    scf.if %8 {
      %c0 = arith.constant 0 : index
      %c0_5 = arith.constant 0 : index
      %c0_6 = arith.constant 0 : index
      %c0_7 = arith.constant 0 : index
      %12 = vector.load %arg4[%c0, %c0_5, %c0_6, %c0_7] : memref<1x1x8x8xbf16, #tpu.memory_space<vmem>>, vector<1x1x8x8xbf16>
      %13 = vector.shape_cast %12 : vector<1x1x8x8xbf16> to vector<8x8xbf16>
      %14 = arith.extf %13 : vector<8x8xbf16> to vector<8x8xf32>
      %c0_8 = arith.constant 0 : index
      %c0_9 = arith.constant 0 : index
      %c0_10 = arith.constant 0 : index
      %c0_11 = arith.constant 0 : index
      %15 = vector.load %arg5[%c0_8, %c0_9, %c0_10, %c0_11] : memref<1x1x8x8xbf16, #tpu.memory_space<vmem>>, vector<1x1x8x8xbf16>
      %16 = vector.shape_cast %15 : vector<1x1x8x8xbf16> to vector<8x8xbf16>
      %17 = arith.extf %16 : vector<8x8xbf16> to vector<8x8xf32>
      %c0_12 = arith.constant 0 : index
      %c0_13 = arith.constant 0 : index
      %18 = vector.load %arg7[%c0_12, %c0_13] : memref<8x4xf32, #tpu.memory_space<vmem>>, vector<8x4xf32>
      %c0_14 = arith.constant 0 : index
      %c0_15 = arith.constant 0 : index
      %19 = vector.load %arg8[%c0_14, %c0_15] : memref<8x4xf32, #tpu.memory_space<vmem>>, vector<8x4xf32>
      %c0_16 = arith.constant 0 : index
      %c0_17 = arith.constant 0 : index
      %20 = vector.load %arg9[%c0_16, %c0_17] : memref<8x4xf32, #tpu.memory_space<vmem>>, vector<8x4xf32>
      %c0_18 = arith.constant 0 : index
      %c0_19 = arith.constant 0 : index
      %21 = vector.load %arg10[%c0_18, %c0_19] : memref<8x4xf32, #tpu.memory_space<vmem>>, vector<8x4xf32>
      %22 = vector.extract_strided_slice %14 {offsets = [0, 0], sizes = [8, 4], strides = [1, 1]} : vector<8x8xf32> to vector<8x4xf32>
      %23 = vector.extract_strided_slice %14 {offsets = [0, 4], sizes = [8, 4], strides = [1, 1]} : vector<8x8xf32> to vector<8x4xf32>
      %24 = vector.extract_strided_slice %17 {offsets = [0, 0], sizes = [8, 4], strides = [1, 1]} : vector<8x8xf32> to vector<8x4xf32>
      %25 = vector.extract_strided_slice %17 {offsets = [0, 4], sizes = [8, 4], strides = [1, 1]} : vector<8x8xf32> to vector<8x4xf32>
      %26 = arith.mulf %22, %18 : vector<8x4xf32>
      %27 = arith.mulf %23, %19 : vector<8x4xf32>
      %28 = arith.subf %26, %27 : vector<8x4xf32>
      %29 = arith.truncf %28 : vector<8x4xf32> to vector<8x4xbf16>
      %30 = arith.mulf %23, %18 : vector<8x4xf32>
      %31 = arith.mulf %22, %19 : vector<8x4xf32>
      %32 = arith.addf %30, %31 : vector<8x4xf32>
      %33 = arith.truncf %32 : vector<8x4xf32> to vector<8x4xbf16>
      %34 = arith.mulf %24, %20 : vector<8x4xf32>
      %35 = arith.mulf %25, %21 : vector<8x4xf32>
      %36 = arith.subf %34, %35 : vector<8x4xf32>
      %37 = arith.truncf %36 : vector<8x4xf32> to vector<8x4xbf16>
      %38 = arith.mulf %25, %20 : vector<8x4xf32>
      %39 = arith.mulf %24, %21 : vector<8x4xf32>
      %40 = arith.addf %38, %39 : vector<8x4xf32>
      %41 = arith.truncf %40 : vector<8x4xf32> to vector<8x4xbf16>
      %cst = arith.constant dense<0.000000e+00> : vector<8x8xf32>
      %42 = tpu.matmul %29, %37, %cst {dimension_numbers = #tpu.dot_dimension_numbers<[1], [1], [0], [0], [0, 0, 1, 0], [], []>} : vector<8x4xbf16>, vector<8x4xbf16>, vector<8x8xf32> -> vector<8x8xf32>
      %cst_20 = arith.constant dense<0.000000e+00> : vector<8x8xf32>
      %43 = tpu.matmul %33, %41, %cst_20 {dimension_numbers = #tpu.dot_dimension_numbers<[1], [1], [0], [0], [0, 0, 1, 0], [], []>} : vector<8x4xbf16>, vector<8x4xbf16>, vector<8x8xf32> -> vector<8x8xf32>
      %44 = arith.addf %42, %43 : vector<8x8xf32>
      %cst_21 = arith.constant 0.353553385 : f32
      %45 = vector.broadcast %cst_21 : f32 to vector<8x8xf32>
      %46 = arith.mulf %44, %45 : vector<8x8xf32>
      %47 = tpu.iota {dimensions = array<i32: 0>} : vector<8x8xi32>
      %48 = vector.broadcast %0 : i32 to vector<8x8xi32>
      %49 = arith.addi %48, %47 : vector<8x8xi32>
      %50 = tpu.iota {dimensions = array<i32: 1>} : vector<8x8xi32>
      %51 = vector.broadcast %1 : i32 to vector<8x8xi32>
      %52 = arith.addi %51, %50 : vector<8x8xi32>
      %53 = arith.cmpi sge, %49, %52 : vector<8x8xi32>
      %cst_22 = arith.constant -1.000000e+30 : f32
      %54 = vector.broadcast %cst_22 : f32 to vector<8x8xf32>
      %55 = arith.select %53, %46, %54 : vector<8x8xi1>, vector<8x8xf32>
      %c0_23 = arith.constant 0 : index
      %c0_24 = arith.constant 0 : index
      %56 = vector.load %arg12[%c0_23, %c0_24] : memref<8x1xf32, #tpu.memory_space<vmem>>, vector<8x1xf32>
      %cst_25 = arith.constant dense<0xFF800000> : vector<8xf32>
      %57 = vector.multi_reduction <maximumf>, %55, %cst_25 [1] : vector<8x8xf32> to vector<8xf32>
      %58 = vector.shape_cast %57 : vector<8xf32> to vector<8x1xf32>
      %59 = arith.maximumf %56, %58 : vector<8x1xf32>
      %60 = arith.subf %56, %59 : vector<8x1xf32>
      %61 = math.exp %60 : vector<8x1xf32>
      %62 = vector.broadcast %59 : vector<8x1xf32> to vector<8x8xf32>
      %63 = arith.subf %55, %62 : vector<8x8xf32>
      %64 = math.exp %63 : vector<8x8xf32>
      %c0_26 = arith.constant 0 : index
      %c0_27 = arith.constant 0 : index
      %65 = vector.load %arg13[%c0_26, %c0_27] : memref<8x1xf32, #tpu.memory_space<vmem>>, vector<8x1xf32>
      %66 = arith.mulf %61, %65 : vector<8x1xf32>
      %cst_28 = arith.constant dense<0.000000e+00> : vector<8xf32>
      %67 = vector.multi_reduction <add>, %64, %cst_28 [1] : vector<8x8xf32> to vector<8xf32>
      %68 = vector.shape_cast %67 : vector<8xf32> to vector<8x1xf32>
      %69 = arith.addf %66, %68 : vector<8x1xf32>
      %c0_29 = arith.constant 0 : index
      %c0_30 = arith.constant 0 : index
      %70 = vector.load %arg13[%c0_29, %c0_30] : memref<8x1xf32, #tpu.memory_space<vmem>>, vector<8x1xf32>
      tpu.vector_store %arg13[%c0_29, %c0_30], %69 {strides = array<i32>} : memref<8x1xf32, #tpu.memory_space<vmem>>, vector<8x1xf32>,
      %c0_31 = arith.constant 0 : index
      %c0_32 = arith.constant 0 : index
      %71 = vector.load %arg14[%c0_31, %c0_32] : memref<8x8xf32, #tpu.memory_space<vmem>>, vector<8x8xf32>
      %72 = vector.broadcast %61 : vector<8x1xf32> to vector<8x8xf32>
      %73 = arith.mulf %72, %71 : vector<8x8xf32>
      %74 = arith.truncf %64 : vector<8x8xf32> to vector<8x8xbf16>
      %c0_33 = arith.constant 0 : index
      %c0_34 = arith.constant 0 : index
      %c0_35 = arith.constant 0 : index
      %c0_36 = arith.constant 0 : index
      %75 = vector.load %arg6[%c0_33, %c0_34, %c0_35, %c0_36] : memref<1x1x8x8xbf16, #tpu.memory_space<vmem>>, vector<1x1x8x8xbf16>
      %76 = vector.shape_cast %75 : vector<1x1x8x8xbf16> to vector<8x8xbf16>
      %cst_37 = arith.constant dense<0.000000e+00> : vector<8x8xf32>
      %77 = tpu.matmul %74, %76, %cst_37 {dimension_numbers = #tpu.dot_dimension_numbers<[1], [0], [0], [1], [0, 0, 1, 1], [], []>} : vector<8x8xbf16>, vector<8x8xbf16>, vector<8x8xf32> -> vector<8x8xf32>
      %78 = arith.addf %73, %77 : vector<8x8xf32>
      %c0_38 = arith.constant 0 : index
      %c0_39 = arith.constant 0 : index
      %79 = vector.load %arg14[%c0_38, %c0_39] : memref<8x8xf32, #tpu.memory_space<vmem>>, vector<8x8xf32>
      tpu.vector_store %arg14[%c0_38, %c0_39], %78 {strides = array<i32>} : memref<8x8xf32, #tpu.memory_space<vmem>>, vector<8x8xf32>,
      %c0_40 = arith.constant 0 : index
      %c0_41 = arith.constant 0 : index
      %80 = vector.load %arg12[%c0_40, %c0_41] : memref<8x1xf32, #tpu.memory_space<vmem>>, vector<8x1xf32>
      tpu.vector_store %arg12[%c0_40, %c0_41], %59 {strides = array<i32>} : memref<8x1xf32, #tpu.memory_space<vmem>>, vector<8x1xf32>,
    } else {
    }
    %c0_i32_3 = arith.constant 0 : i32
    %9 = arith.cmpi eq, %arg3, %c0_i32_3 : i32
    %10 = arith.extui %9 : i1 to i32
    %c0_i32_4 = arith.constant 0 : i32
    %11 = arith.cmpi ne, %10, %c0_i32_4 : i32
    scf.if %11 {
      %c0 = arith.constant 0 : index
      %c0_5 = arith.constant 0 : index
      %12 = vector.load %arg14[%c0, %c0_5] : memref<8x8xf32, #tpu.memory_space<vmem>>, vector<8x8xf32>
      %c0_6 = arith.constant 0 : index
      %c0_7 = arith.constant 0 : index
      %13 = vector.load %arg13[%c0_6, %c0_7] : memref<8x1xf32, #tpu.memory_space<vmem>>, vector<8x1xf32>
      %14 = tpu.reciprocal %13 {approx = true} : vector<8x1xf32> -> vector<8x1xf32>
      %15 = vector.broadcast %14 : vector<8x1xf32> to vector<8x8xf32>
      %16 = arith.mulf %12, %15 : vector<8x8xf32>
      %17 = arith.truncf %16 : vector<8x8xf32> to vector<8x8xbf16>
      %c0_8 = arith.constant 0 : index
      %c0_9 = arith.constant 0 : index
      %c0_10 = arith.constant 0 : index
      %c0_11 = arith.constant 0 : index
      %18 = vector.load %arg11[%c0_8, %c0_9, %c0_10, %c0_11] : memref<1x1x8x8xbf16, #tpu.memory_space<vmem>>, vector<1x1x8x8xbf16>
      %19 = vector.shape_cast %18 : vector<1x1x8x8xbf16> to vector<8x8xbf16>
      %20 = vector.shape_cast %17 : vector<8x8xbf16> to vector<1x1x8x8xbf16>
      tpu.vector_store %arg11[%c0_8, %c0_9, %c0_10, %c0_11], %20 {strides = array<i32>} : memref<1x1x8x8xbf16, #tpu.memory_space<vmem>>, vector<1x1x8x8xbf16>,
    } else {
    }
    return
  }
  func.func @transform_0(%arg0: i32, %arg1: i32, %arg2: i32, %arg3: i32) -> (i32, i32, i32, i32) {
    %c0_i32 = arith.constant 0 : i32
    %c0_i32_0 = arith.constant 0 : i32
    return %arg0, %arg1, %arg2, %c0_i32 : i32, i32, i32, i32
  }
  func.func @transform_1(%arg0: i32, %arg1: i32, %arg2: i32, %arg3: i32) -> (i32, i32, i32, i32) {
    %c0_i32 = arith.constant 0 : i32
    %c0_i32_0 = arith.constant 0 : i32
    return %arg0, %arg1, %arg3, %c0_i32 : i32, i32, i32, i32
  }
  func.func @transform_2(%arg0: i32, %arg1: i32, %arg2: i32, %arg3: i32) -> (i32, i32, i32, i32) {
    %c0_i32 = arith.constant 0 : i32
    %c0_i32_0 = arith.constant 0 : i32
    return %arg0, %arg1, %arg3, %c0_i32 : i32, i32, i32, i32
  }
  func.func @transform_3(%arg0: i32, %arg1: i32, %arg2: i32, %arg3: i32) -> (i32, i32) {
    %c0_i32 = arith.constant 0 : i32
    %c0_i32_0 = arith.constant 0 : i32
    return %arg2, %c0_i32 : i32, i32
  }
  func.func @transform_4(%arg0: i32, %arg1: i32, %arg2: i32, %arg3: i32) -> (i32, i32) {
    %c0_i32 = arith.constant 0 : i32
    %c0_i32_0 = arith.constant 0 : i32
    return %arg2, %c0_i32 : i32, i32
  }
  func.func @transform_5(%arg0: i32, %arg1: i32, %arg2: i32, %arg3: i32) -> (i32, i32) {
    %c0_i32 = arith.constant 0 : i32
    %c0_i32_0 = arith.constant 0 : i32
    return %arg3, %c0_i32 : i32, i32
  }
  func.func @transform_6(%arg0: i32, %arg1: i32, %arg2: i32, %arg3: i32) -> (i32, i32) {
    %c0_i32 = arith.constant 0 : i32
    %c0_i32_0 = arith.constant 0 : i32
    return %arg3, %c0_i32 : i32, i32
  }
  func.func @transform_7(%arg0: i32, %arg1: i32, %arg2: i32, %arg3: i32) -> (i32, i32, i32, i32) {
    %c0_i32 = arith.constant 0 : i32
    %c0_i32_0 = arith.constant 0 : i32
    return %arg0, %arg1, %arg2, %c0_i32 : i32, i32, i32, i32
  }
}

module attributes {stable_mosaic.version = 11 : i64} {
  func.func @_residual_matmul_kernel(%arg0: i32, %arg1: i32, %arg2: memref<16x32xf32, #tpu.memory_space<vmem>>, %arg3: memref<16x32xbf16, #tpu.memory_space<vmem>>, %arg4: memref<32x32xbf16, #tpu.memory_space<vmem>>, %arg5: memref<16x32xf32, #tpu.memory_space<vmem>>) attributes {dimension_semantics = [#tpu.dimension_semantics<parallel>, #tpu.dimension_semantics<parallel>], iteration_bounds = array<i64: 1, 1>, scalar_prefetch = 0 : i64, scratch_operands = 0 : i64, tpu.core_type = #tpu.core_type<tc>, window_params = [{transform_indices = @transform_0, window_bounds = array<i64: 16, 32>}, {transform_indices = @transform_1, window_bounds = array<i64: 16, 32>}, {transform_indices = @transform_2, window_bounds = array<i64: 32, 32>}, {transform_indices = @transform_3, window_bounds = array<i64: 16, 32>}]} {
    %c0 = arith.constant 0 : index
    %c0_0 = arith.constant 0 : index
    %0 = vector.load %arg2[%c0, %c0_0] : memref<16x32xf32, #tpu.memory_space<vmem>>, vector<16x32xf32>
    %c0_1 = arith.constant 0 : index
    %c0_2 = arith.constant 0 : index
    %1 = vector.load %arg3[%c0_1, %c0_2] : memref<16x32xbf16, #tpu.memory_space<vmem>>, vector<16x32xbf16>
    %c0_3 = arith.constant 0 : index
    %c0_4 = arith.constant 0 : index
    %2 = vector.load %arg4[%c0_3, %c0_4] : memref<32x32xbf16, #tpu.memory_space<vmem>>, vector<32x32xbf16>
    %cst = arith.constant dense<0.000000e+00> : vector<16x32xf32>
    %3 = tpu.matmul %1, %2, %cst {dimension_numbers = #tpu.dot_dimension_numbers<[1], [0], [0], [1], [0, 0, 1, 1], [], []>} : vector<16x32xbf16>, vector<32x32xbf16>, vector<16x32xf32> -> vector<16x32xf32>
    %4 = arith.addf %0, %3 : vector<16x32xf32>
    %c0_5 = arith.constant 0 : index
    %c0_6 = arith.constant 0 : index
    %5 = vector.load %arg5[%c0_5, %c0_6] : memref<16x32xf32, #tpu.memory_space<vmem>>, vector<16x32xf32>
    tpu.vector_store %arg5[%c0_5, %c0_6], %4 {strides = array<i32>} : memref<16x32xf32, #tpu.memory_space<vmem>>, vector<16x32xf32>,
    return
  }
  func.func @transform_0(%arg0: i32, %arg1: i32) -> (i32, i32) {
    %c0_i32 = arith.constant 0 : i32
    return %arg0, %arg1 : i32, i32
  }
  func.func @transform_1(%arg0: i32, %arg1: i32) -> (i32, i32) {
    %c0_i32 = arith.constant 0 : i32
    %c0_i32_0 = arith.constant 0 : i32
    return %arg0, %c0_i32 : i32, i32
  }
  func.func @transform_2(%arg0: i32, %arg1: i32) -> (i32, i32) {
    %c0_i32 = arith.constant 0 : i32
    %c0_i32_0 = arith.constant 0 : i32
    return %c0_i32, %arg1 : i32, i32
  }
  func.func @transform_3(%arg0: i32, %arg1: i32) -> (i32, i32) {
    %c0_i32 = arith.constant 0 : i32
    return %arg0, %arg1 : i32, i32
  }
}

module attributes {stable_mosaic.version = 11 : i64} {
  func.func @_mlp_kernel(%arg0: i32, %arg1: i32, %arg2: memref<16x32xf32, #tpu.memory_space<vmem>>, %arg3: memref<1x32xf32, #tpu.memory_space<vmem>>, %arg4: memref<32x256xbf16, #tpu.memory_space<vmem>>, %arg5: memref<32x256xbf16, #tpu.memory_space<vmem>>, %arg6: memref<256x32xbf16, #tpu.memory_space<vmem>>, %arg7: memref<16x32xf32, #tpu.memory_space<vmem>>) attributes {dimension_semantics = [#tpu.dimension_semantics<parallel>, #tpu.dimension_semantics<arbitrary>], iteration_bounds = array<i64: 1, 1>, scalar_prefetch = 0 : i64, scratch_operands = 0 : i64, tpu.core_type = #tpu.core_type<tc>, window_params = [{transform_indices = @transform_0, window_bounds = array<i64: 16, 32>}, {pipeline_mode = #tpu.pipeline_mode<synchronous>, transform_indices = @transform_1, window_bounds = array<i64: 1, 32>}, {transform_indices = @transform_2, window_bounds = array<i64: 32, 256>}, {transform_indices = @transform_3, window_bounds = array<i64: 32, 256>}, {transform_indices = @transform_4, window_bounds = array<i64: 256, 32>}, {transform_indices = @transform_5, window_bounds = array<i64: 16, 32>}]} {
    %c0_i32 = arith.constant 0 : i32
    %0 = arith.cmpi eq, %arg1, %c0_i32 : i32
    %1 = arith.extui %0 : i1 to i32
    %c0_i32_0 = arith.constant 0 : i32
    %2 = arith.cmpi ne, %1, %c0_i32_0 : i32
    scf.if %2 {
      %c0_20 = arith.constant 0 : index
      %c0_21 = arith.constant 0 : index
      %35 = vector.load %arg2[%c0_20, %c0_21] : memref<16x32xf32, #tpu.memory_space<vmem>>, vector<16x32xf32>
      %c0_22 = arith.constant 0 : index
      %c0_23 = arith.constant 0 : index
      %36 = vector.load %arg7[%c0_22, %c0_23] : memref<16x32xf32, #tpu.memory_space<vmem>>, vector<16x32xf32>
      tpu.vector_store %arg7[%c0_22, %c0_23], %35 {strides = array<i32>} : memref<16x32xf32, #tpu.memory_space<vmem>>, vector<16x32xf32>,
    } else {
    }
    %c0 = arith.constant 0 : index
    %c0_1 = arith.constant 0 : index
    %3 = vector.load %arg2[%c0, %c0_1] : memref<16x32xf32, #tpu.memory_space<vmem>>, vector<16x32xf32>
    %4 = arith.mulf %3, %3 : vector<16x32xf32>
    %cst = arith.constant dense<0.000000e+00> : vector<16xf32>
    %5 = vector.multi_reduction <add>, %4, %cst [1] : vector<16x32xf32> to vector<16xf32>
    %6 = vector.shape_cast %5 : vector<16xf32> to vector<16x1xf32>
    %cst_2 = arith.constant 3.200000e+01 : f32
    %7 = vector.broadcast %cst_2 : f32 to vector<16x1xf32>
    %8 = arith.divf %6, %7 : vector<16x1xf32>
    %cst_3 = arith.constant 9.99999997E-7 : f32
    %9 = vector.broadcast %cst_3 : f32 to vector<16x1xf32>
    %10 = arith.addf %8, %9 : vector<16x1xf32>
    %11 = math.rsqrt %10 : vector<16x1xf32>
    %12 = vector.broadcast %11 : vector<16x1xf32> to vector<16x32xf32>
    %13 = arith.mulf %3, %12 : vector<16x32xf32>
    %c0_4 = arith.constant 0 : index
    %c0_5 = arith.constant 0 : index
    %14 = vector.load %arg3[%c0_4, %c0_5] : memref<1x32xf32, #tpu.memory_space<vmem>>, vector<1x32xf32>
    %15 = vector.broadcast %14 : vector<1x32xf32> to vector<16x32xf32>
    %16 = arith.mulf %13, %15 : vector<16x32xf32>
    %17 = arith.truncf %16 : vector<16x32xf32> to vector<16x32xbf16>
    %c0_6 = arith.constant 0 : index
    %c0_7 = arith.constant 0 : index
    %18 = vector.load %arg4[%c0_6, %c0_7] : memref<32x256xbf16, #tpu.memory_space<vmem>>, vector<32x256xbf16>
    %cst_8 = arith.constant dense<0.000000e+00> : vector<16x256xf32>
    %19 = tpu.matmul %17, %18, %cst_8 {dimension_numbers = #tpu.dot_dimension_numbers<[1], [0], [0], [1], [0, 0, 1, 1], [], []>} : vector<16x32xbf16>, vector<32x256xbf16>, vector<16x256xf32> -> vector<16x256xf32>
    %c0_9 = arith.constant 0 : index
    %c0_10 = arith.constant 0 : index
    %20 = vector.load %arg5[%c0_9, %c0_10] : memref<32x256xbf16, #tpu.memory_space<vmem>>, vector<32x256xbf16>
    %cst_11 = arith.constant dense<0.000000e+00> : vector<16x256xf32>
    %21 = tpu.matmul %17, %20, %cst_11 {dimension_numbers = #tpu.dot_dimension_numbers<[1], [0], [0], [1], [0, 0, 1, 1], [], []>} : vector<16x32xbf16>, vector<32x256xbf16>, vector<16x256xf32> -> vector<16x256xf32>
    %22 = arith.negf %19 : vector<16x256xf32>
    %23 = math.exp %22 : vector<16x256xf32>
    %cst_12 = arith.constant 1.000000e+00 : f32
    %24 = vector.broadcast %cst_12 : f32 to vector<16x256xf32>
    %25 = arith.addf %24, %23 : vector<16x256xf32>
    %26 = arith.divf %24, %25 : vector<16x256xf32>
    %27 = arith.mulf %19, %26 : vector<16x256xf32>
    %28 = arith.mulf %27, %21 : vector<16x256xf32>
    %c0_13 = arith.constant 0 : index
    %c0_14 = arith.constant 0 : index
    %29 = vector.load %arg7[%c0_13, %c0_14] : memref<16x32xf32, #tpu.memory_space<vmem>>, vector<16x32xf32>
    %30 = arith.truncf %28 : vector<16x256xf32> to vector<16x256xbf16>
    %c0_15 = arith.constant 0 : index
    %c0_16 = arith.constant 0 : index
    %31 = vector.load %arg6[%c0_15, %c0_16] : memref<256x32xbf16, #tpu.memory_space<vmem>>, vector<256x32xbf16>
    %cst_17 = arith.constant dense<0.000000e+00> : vector<16x32xf32>
    %32 = tpu.matmul %30, %31, %cst_17 {dimension_numbers = #tpu.dot_dimension_numbers<[1], [0], [0], [1], [0, 0, 1, 1], [], []>} : vector<16x256xbf16>, vector<256x32xbf16>, vector<16x32xf32> -> vector<16x32xf32>
    %33 = arith.addf %29, %32 : vector<16x32xf32>
    %c0_18 = arith.constant 0 : index
    %c0_19 = arith.constant 0 : index
    %34 = vector.load %arg7[%c0_18, %c0_19] : memref<16x32xf32, #tpu.memory_space<vmem>>, vector<16x32xf32>
    tpu.vector_store %arg7[%c0_18, %c0_19], %33 {strides = array<i32>} : memref<16x32xf32, #tpu.memory_space<vmem>>, vector<16x32xf32>,
    return
  }
  func.func @transform_0(%arg0: i32, %arg1: i32) -> (i32, i32) {
    %c0_i32 = arith.constant 0 : i32
    %c0_i32_0 = arith.constant 0 : i32
    return %arg0, %c0_i32 : i32, i32
  }
  func.func @transform_1(%arg0: i32, %arg1: i32) -> (i32, i32) {
    %c0_i32 = arith.constant 0 : i32
    %c0_i32_0 = arith.constant 0 : i32
    %c0_i32_1 = arith.constant 0 : i32
    return %c0_i32, %c0_i32_0 : i32, i32
  }
  func.func @transform_2(%arg0: i32, %arg1: i32) -> (i32, i32) {
    %c0_i32 = arith.constant 0 : i32
    %c0_i32_0 = arith.constant 0 : i32
    return %c0_i32, %arg1 : i32, i32
  }
  func.func @transform_3(%arg0: i32, %arg1: i32) -> (i32, i32) {
    %c0_i32 = arith.constant 0 : i32
    %c0_i32_0 = arith.constant 0 : i32
    return %c0_i32, %arg1 : i32, i32
  }
  func.func @transform_4(%arg0: i32, %arg1: i32) -> (i32, i32) {
    %c0_i32 = arith.constant 0 : i32
    %c0_i32_0 = arith.constant 0 : i32
    return %arg1, %c0_i32 : i32, i32
  }
  func.func @transform_5(%arg0: i32, %arg1: i32) -> (i32, i32) {
    %c0_i32 = arith.constant 0 : i32
    %c0_i32_0 = arith.constant 0 : i32
    return %arg0, %c0_i32 : i32, i32
  }
}

</mosaic_0001>

<llo_original>
// kernel: block_forward.4
$region0: #{block_forward.4}
  #allocation0 [shape = 'u32[]', space=smem, size = 0x4, offset = 0x4, fixed_abs, tag = 'smem constant byte address 0x4 - core index']
  #allocation1 [shape = 'u32[144,128]{1,0:T(1,128)}', space=vmem, size = 0x12000, scoped, tag = 'internal scratch']
  %s0 = inlined_call_operand.vmem [shape: f32[16,32], index: 0, kind: input, shape index: {}]
  %s1 = inlined_call_operand.vmem [shape: f32[1,32], index: 1, kind: input, shape index: {}]
  %s2 = inlined_call_operand.hbm [shape: bf16[32,96], index: 2, kind: input, shape index: {}]
  %s3 = inlined_call_operand.vmem [shape: bf16[16,96], index: 3, kind: output, shape index: {}]
  %s4 = sld [smem:[#allocation0]]
  $region26: #{block_forward.4} parent=0
    _
  %s6 = ssub.s32 1, %s4
  %s7 = scalar_select 0, %s6, %s4
  $region1: #{block_forward.4} parent=0
    #allocation2 [shape = 'u8[8192]{0}', space=vmem, size = 0x2000, scoped, tag = 'input window, operand 2, single buffered']
    #allocation3 [shape = 's32[1]{0}', space=sflag, size = 0x4, scoped, tag = 'scoped memory for block_forward.4']
    %8 = vsyncpa [#allocation3], 0
    // Predicated region
    $region2: #{block_forward.4} parent=1 // pred_check
      _
    $region3: #{block_forward.4} parent=1 // pred_check_branch
      %10 = sbr.rel (0) target = $region5
    $region4: #{block_forward.4} parent=1 // pred_region
      _
    $region5: #{block_forward.4} parent=1 // pred_fallthru
      _
    // Predicated region
    $region6: #{block_forward.4} parent=1 // pred_check
      _
    $region7: #{block_forward.4} parent=1 // pred_check_branch
      %12 = sbr.rel (0) target = $region9
    $region8: #{block_forward.4} parent=1 // pred_region
      _
    $region9: #{block_forward.4} parent=1 // pred_fallthru
      _
    // Predicated region
    $region10: #{block_forward.4} parent=1 // pred_check
      _
    $region11: #{block_forward.4} parent=1 // pred_check_branch
      %14 = sbr.rel (0) target = $region13
    $region12: #{block_forward.4} parent=1 // pred_region
      %s16 = ssub.s32 256, 256
      %17 = vsyncadd [#allocation3], %s16
      %s18 = sshll.u32 [#allocation2], 4
      %s19 = int_to_ptr.vmem [resolvable:$true] %s18
      %24 = dma.hbm_to_vmem [thread:$0]  %s2, 256, %s19, [#allocation3], 64, 64, 4
    $region13: #{block_forward.4} parent=1 // pred_fallthru
      _
    // Predicated region
    $region14: #{block_forward.4} parent=1 // pred_check
      _
    $region15: #{block_forward.4} parent=1 // pred_check_branch
      %26 = sbr.rel (0) target = $region17
    $region16: #{block_forward.4} parent=1 // pred_region
      %27 = dma.done [#allocation3], 256
    $region17: #{block_forward.4} parent=1 // pred_fallthru
      _
    %v29 = vld [vmem:[%s0] sm:$0xff]
    %v30 = vld [vmem:[%s0 + $0x8] sm:$0xff]
    %v31 = vmul.f32 %v29, %v29
    %v32 = vmul.f32 %v30, %v30
    %vm33 = vcmask 261120
    %v34 = vsel %vm33, %v31, 0.0
    %35 = vadd.xlane.f32.xlu0 %v34
    %v36 = vpop.xlane.xlu0 %35
    %v37 = vsel %vm33, %v32, 0.0
    %38 = vadd.xlane.f32.xlu0 %v37
    %v39 = vpop.xlane.xlu0 %38
    %v40 = vrcp.pop 32.0
    %v41 = vmul.f32 %v36, %v40
    %v42 = vmul.f32 %v39, %v40
    %v43 = vadd.f32 %v41, 1e-06
    %v44 = vadd.f32 %v42, 1e-06
    %v45 = vrsqrt.pop %v43
    %v46 = vrsqrt.pop %v44
    %v47 = vmul.f32 %v29, %v45
    %v48 = vmul.f32 %v30, %v46
    %v49 = vld [vmem:[%s1] sm:$0x1]
    %v51 = vlaneseq
    %v52 = vshrl.u32 %v51, 7
    %v53 = vsub.s32 0, %v52
    %v54 = vrot.slane %v49, %v53
    %v56 = vmul.f32 %v47, %v54
    %v57 = vmul.f32 %v48, %v54
    %v58 = vpack.c.bf16 %v57, %v56
    %v59 = vld [vmem:[#allocation2] sm:$0xf]
    %v60 = vld [vmem:[#allocation2 + $0x4] sm:$0xf]
    %v61 = vld [vmem:[#allocation2 + $0x8] sm:$0xf]
    %v62 = vld [vmem:[#allocation2 + $0xc] sm:$0xf]
    %v67 = vunpack.c.l.b16 %v59
    %v68 = vunpack.c.l.b16 %v60
    %v69 = vunpack.c.l.b16 %v61
    %v70 = vunpack.c.l.b16 %v62
    %v71 = vpack.c.b16 %v68, %v67
    %v72 = vpack.c.b16 %v70, %v69
    %v76 = vsel %vm33, %v58, 0
    %78 = vmatprep.subr.bf16.mxu0 0
    %79 = vmatpush1.bf16.msra.mxu0 0
    %80 = vmatprep.subr.bf16.mxu0 0
    %81 = vmatpush1.bf16.msra.mxu0 0
    %82 = vmatprep.subr.bf16.mxu0 0
    %83 = vmatpush1.bf16.msra.mxu0 0
    %84 = vmatprep.subr.bf16.mxu0 0
    %85 = vmatpush1.bf16.msra.mxu0 0
    %86 = vmatprep.subr.bf16.mxu0 0
    %87 = vmatpush1.bf16.msra.mxu0 0
    %88 = vmatprep.subr.bf16.mxu0 0
    %89 = vmatpush1.bf16.msra.mxu0 0
    %90 = vmatprep.subr.bf16.mxu0 0
    %91 = vmatpush1.bf16.msra.mxu0 %v72
    %92 = vmatprep.subr.bf16.mxu0 0
    %93 = vmatpush1.bf16.msra.mxu0 %v71
    %94 = vmatprep.subr.bf16.mxu0 0
    %95 = vmatpush2.bf16.msra.mxu0 0
    %96 = vmatprep.subr.bf16.mxu0 0
    %97 = vmatpush2.bf16.msra.mxu0 0
    %98 = vmatprep.subr.bf16.mxu0 0
    %99 = vmatpush2.bf16.msra.mxu0 0
    %100 = vmatprep.subr.bf16.mxu0 0
    %101 = vmatpush2.bf16.msra.mxu0 0
    %102 = vmatprep.subr.bf16.mxu0 0
    %103 = vmatpush2.bf16.msra.mxu0 0
    %104 = vmatprep.subr.bf16.mxu0 0
    %105 = vmatpush2.bf16.msra.mxu0 0
    %106 = vmatprep.subr.bf16.mxu0 0
    %107 = vmatpush2.bf16.msra.mxu0 0
    %108 = vmatprep.subr.bf16.mxu0 0
    %109 = vmatpush2.bf16.msra.mxu0 0
    %110 = vmatprep.mubr.bf16.mxu0 0
    %111 = vmatmul.mubr.bf16.gmra.mxu0 %v76
    %v112 = vpop.f32.mrf.mxu0
    %v113 = vadd.f32 0.0, %v112
    %v114 = vpop.f32.mrf.mxu0
    %v115 = vpop.f32.mrf.mxu0
    %v116 = vadd.f32 0.0, %v115
    %v117 = vpop.f32.mrf.mxu0
    %118 = vdwg.mxu0
    %v119 = vpack.c.bf16 %v116, %v113
    %v121 = vunpack.c.l.b16 %v119
    %v122 = vunpack.c.h.b16 %v119
    %v123 = vpack.c.b16 %v121, %v121
    %v124 = vpack.c.b16 %v122, %v122
    %vm127 = vcmask 781312
    %128 = vst.msk [vmem:[%s3] sm:$0xf] %vm127, %v123
    %129 = vst.msk [vmem:[%s3 + $0x4] sm:$0xf] %vm127, %v124
    // Predicated region
    $region18: #{block_forward.4} parent=1 // pred_check
      _
    $region19: #{block_forward.4} parent=1 // pred_check_branch
      %131 = sbr.rel (0) target = $region21
    $region20: #{block_forward.4} parent=1 // pred_region
      _
    $region21: #{block_forward.4} parent=1 // pred_fallthru
      _
    // Predicated region
    $region22: #{block_forward.4} parent=1 // pred_check
      _
    $region23: #{block_forward.4} parent=1 // pred_check_branch
      %133 = sbr.rel (0) target = $region25
    $region24: #{block_forward.4} parent=1 // pred_region
      _
    $region25: #{block_forward.4} parent=1 // pred_fallthru
      _
    %134 = vsyncpa [#allocation3], 1

// kernel: block_forward.5
$region0: #{block_forward.5}
  #allocation0 [shape = 'u32[]', space=smem, size = 0x4, offset = 0x4, fixed_abs, tag = 'smem constant byte address 0x4 - core index']
  #allocation1 [shape = 'u32[144,128]{1,0:T(1,128)}', space=vmem, size = 0x12000, scoped, tag = 'internal scratch']
  #allocation2 [shape = 'f32[8,1]{1,0:T(8,128)}', space=vmem, size = 0x1000, scoped, tag = 'scratch operand']
  #allocation3 [shape = 'f32[8,1]{1,0:T(8,128)}', space=vmem, size = 0x1000, scoped, tag = 'scratch operand']
  #allocation4 [shape = 'f32[8,8]{1,0:T(8,128)}', space=vmem, size = 0x1000, scoped, tag = 'scratch operand']
  %s0 = inlined_call_operand.vmem [shape: bf16[2,4,8,8], index: 0, kind: input, shape index: {}]
  %s1 = inlined_call_operand.vmem [shape: bf16[2,4,8,8], index: 1, kind: input, shape index: {}]
  %s2 = inlined_call_operand.vmem [shape: bf16[2,4,8,8], index: 2, kind: input, shape index: {}]
  %s3 = inlined_call_operand.vmem [shape: f32[8,4], index: 3, kind: input, shape index: {}, may-alias: {3,5}]
  %s4 = inlined_call_operand.vmem [shape: f32[8,4], index: 4, kind: input, shape index: {}, may-alias: {4,6}]
  %s5 = inlined_call_operand.vmem [shape: f32[8,4], index: 5, kind: input, shape index: {}, may-alias: {3,5}]
  %s6 = inlined_call_operand.vmem [shape: f32[8,4], index: 6, kind: input, shape index: {}, may-alias: {4,6}]
  %s7 = inlined_call_operand.vmem [shape: bf16[2,4,8,8], index: 7, kind: output, shape index: {}]
  %s8 = sld [smem:[#allocation0]]
  $region73: #{block_forward.5} parent=0
    _
  %s10 = ssub.s32 1, %s8
  %s11 = scalar_select 0, %s10, %s8
  loop: start=0, step=1, limit=10
  $region2: #{block_forward.5} parent=0 // loop_pre_header
    _
  $region3: #{block_forward.5} parent=0 // loop_header
    %s13 = sphi 0, %s17
    %p14 = scmp.ge.s32.totalorder %s13, 10
    %s20 = sphi 0, %s46
    %s21 = sphi 0, %s42
    %s22 = sphi 0, %s38
    %s23 = sphi 0, %s34
    %s24 = sphi 0, %s20
    %s25 = sphi 0, %s21
    %s26 = sphi 0, %s22
    %s27 = sphi 0, %s23
    %s28 = sphi 0, %s24
    %s29 = sphi 0, %s25
    %s30 = sphi 0, %s26
    %s31 = sphi 0, %s27
    %s53 = sphi 0, %s55
    %s56 = sphi 0, %s53
    %s57 = sphi 0, %s56
    %s73 = sphi 0, %s57
    %s83 = sphi 0, %s85
    %s86 = sphi 0, %s83
    %s87 = sphi 0, %s86
    %s103 = sphi 0, %s87
    %s113 = sphi 0, %s115
    %s116 = sphi 0, %s113
    %s117 = sphi 0, %s116
    %s133 = sphi 0, %s117
    %s139 = sphi 0, %s141
    %s142 = sphi 0, %s139
    %s143 = sphi 0, %s142
    %s159 = sphi 0, %s143
    %s165 = sphi 0, %s167
    %s168 = sphi 0, %s165
    %s169 = sphi 0, %s168
    %s185 = sphi 0, %s169
    %s191 = sphi 0, %s193
    %s194 = sphi 0, %s191
    %s195 = sphi 0, %s194
    %s211 = sphi 0, %s195
    %s217 = sphi 0, %s219
    %s220 = sphi 0, %s217
    %s221 = sphi 0, %s220
    %s237 = sphi 0, %s221
    %s247 = sphi 0, %s249
    %s250 = sphi 0, %s247
    %s251 = sphi 0, %s250
    %s267 = sphi 0, %s251
  $region4: #{block_forward.5} parent=0 // loop_header_branch
    %16 = sbr.rel (%p14) target = $region8
  $region5: #{block_forward.5} parent=0 // loop_body
    %s18 = ssub.s32 %s13, 1
    %s19 = ssub.s32 %s13, 2
    %s32 = sadd.s32 1, %s23
    %p33 = scmp.ge.s32.totalorder %s32, 1
    %s34 = scalar_select %p33, 0, %s32
    %s35 = sadd.s32 1, %s22
    %s36 = scalar_select %p33, %s35, %s22
    %p37 = scmp.ge.s32.totalorder %s36, 1
    %s38 = scalar_select %p37, 0, %s36
    %s39 = sadd.s32 1, %s21
    %s40 = scalar_select %p37, %s39, %s21
    %p41 = scmp.ge.s32.totalorder %s40, 4
    %s42 = scalar_select %p41, 0, %s40
    %s43 = sadd.s32 1, %s20
    %s44 = scalar_select %p41, %s43, %s20
    %p45 = scmp.ge.s32.totalorder %s44, 2
    %s46 = scalar_select %p45, 0, %s44
    %s47 = ssub.s32 %s20, %s46
    %s48 = ssub.s32 %s21, %s42
    %s49 = sor.u32 %s47, %s48
    %s50 = ssub.s32 %s22, %s38
    %s51 = sor.u32 %s49, %s50
    %p52 = scmp.eq.s32.totalorder %s51, 0
    %s54 = sadd.s32 %s53, 1
    %s55 = scalar_select %p52, %s53, %s54
    %p58 = pneg %p52
    %p59 = scmp.eq.s32.totalorder %s13, 7
    %p60 = por %p58, %p59
    %p61 = scmp.ne.s32.totalorder %s53, %s56
    %p62 = scmp.eq.s32.totalorder %s13, 0
    %p63 = por %p61, %p62
    %p64 = scmp.ne.s32.totalorder %s53, %s56
    %p65 = scmp.eq.s32.totalorder %s18, 7
    %p66 = por %p64, %p65
    %p67 = scmp.ne.s32.totalorder %s56, %s57
    %p68 = scmp.eq.s32.totalorder %s18, 0
    %p69 = por %p67, %p68
    %p70 = scmp.ne.s32.totalorder %s56, %s57
    %p71 = scmp.eq.s32.totalorder %s19, 7
    %p72 = por %p70, %p71
    %p74 = scmp.ne.s32.totalorder %s57, %s73
    %p75 = scmp.eq.s32.totalorder %s19, 0
    %p76 = por %p74, %p75
    %s77 = ssub.s32 %s20, %s46
    %s78 = ssub.s32 %s21, %s42
    %s79 = sor.u32 %s77, %s78
    %s80 = ssub.s32 %s23, %s34
    %s81 = sor.u32 %s79, %s80
    %p82 = scmp.eq.s32.totalorder %s81, 0
    %s84 = sadd.s32 %s83, 1
    %s85 = scalar_select %p82, %s83, %s84
    %p88 = pneg %p82
    %p89 = scmp.eq.s32.totalorder %s13, 7
    %p90 = por %p88, %p89
    %p91 = scmp.ne.s32.totalorder %s83, %s86
    %p92 = scmp.eq.s32.totalorder %s13, 0
    %p93 = por %p91, %p92
    %p94 = scmp.ne.s32.totalorder %s83, %s86
    %p95 = scmp.eq.s32.totalorder %s18, 7
    %p96 = por %p94, %p95
    %p97 = scmp.ne.s32.totalorder %s86, %s87
    %p98 = scmp.eq.s32.totalorder %s18, 0
    %p99 = por %p97, %p98
    %p100 = scmp.ne.s32.totalorder %s86, %s87
    %p101 = scmp.eq.s32.totalorder %s19, 7
    %p102 = por %p100, %p101
    %p104 = scmp.ne.s32.totalorder %s87, %s103
    %p105 = scmp.eq.s32.totalorder %s19, 0
    %p106 = por %p104, %p105
    %s107 = ssub.s32 %s20, %s46
    %s108 = ssub.s32 %s21, %s42
    %s109 = sor.u32 %s107, %s108
    %s110 = ssub.s32 %s23, %s34
    %s111 = sor.u32 %s109, %s110
    %p112 = scmp.eq.s32.totalorder %s111, 0
    %s114 = sadd.s32 %s113, 1
    %s115 = scalar_select %p112, %s113, %s114
    %p118 = pneg %p112
    %p119 = scmp.eq.s32.totalorder %s13, 7
    %p120 = por %p118, %p119
    %p121 = scmp.ne.s32.totalorder %s113, %s116
    %p122 = scmp.eq.s32.totalorder %s13, 0
    %p123 = por %p121, %p122
    %p124 = scmp.ne.s32.totalorder %s113, %s116
    %p125 = scmp.eq.s32.totalorder %s18, 7
    %p126 = por %p124, %p125
    %p127 = scmp.ne.s32.totalorder %s116, %s117
    %p128 = scmp.eq.s32.totalorder %s18, 0
    %p129 = por %p127, %p128
    %p130 = scmp.ne.s32.totalorder %s116, %s117
    %p131 = scmp.eq.s32.totalorder %s19, 7
    %p132 = por %p130, %p131
    %p134 = scmp.ne.s32.totalorder %s117, %s133
    %p135 = scmp.eq.s32.totalorder %s19, 0
    %p136 = por %p134, %p135
    %s137 = ssub.s32 %s22, %s38
    %p138 = scmp.eq.s32.totalorder %s137, 0
    %s140 = sadd.s32 %s139, 1
    %s141 = scalar_select %p138, %s139, %s140
    %p144 = pneg %p138
    %p145 = scmp.eq.s32.totalorder %s13, 7
    %p146 = por %p144, %p145
    %p147 = scmp.ne.s32.totalorder %s139, %s142
    %p148 = scmp.eq.s32.totalorder %s13, 0
    %p149 = por %p147, %p148
    %p150 = scmp.ne.s32.totalorder %s139, %s142
    %p151 = scmp.eq.s32.totalorder %s18, 7
    %p152 = por %p150, %p151
    %p153 = scmp.ne.s32.totalorder %s142, %s143
    %p154 = scmp.eq.s32.totalorder %s18, 0
    %p155 = por %p153, %p154
    %p156 = scmp.ne.s32.totalorder %s142, %s143
    %p157 = scmp.eq.s32.totalorder %s19, 7
    %p158 = por %p156, %p157
    %p160 = scmp.ne.s32.totalorder %s143, %s159
    %p161 = scmp.eq.s32.totalorder %s19, 0
    %p162 = por %p160, %p161
    %s163 = ssub.s32 %s22, %s38
    %p164 = scmp.eq.s32.totalorder %s163, 0
    %s166 = sadd.s32 %s165, 1
    %s167 = scalar_select %p164, %s165, %s166
    %p170 = pneg %p164
    %p171 = scmp.eq.s32.totalorder %s13, 7
    %p172 = por %p170, %p171
    %p173 = scmp.ne.s32.totalorder %s165, %s168
    %p174 = scmp.eq.s32.totalorder %s13, 0
    %p175 = por %p173, %p174
    %p176 = scmp.ne.s32.totalorder %s165, %s168
    %p177 = scmp.eq.s32.totalorder %s18, 7
    %p178 = por %p176, %p177
    %p179 = scmp.ne.s32.totalorder %s168, %s169
    %p180 = scmp.eq.s32.totalorder %s18, 0
    %p181 = por %p179, %p180
    %p182 = scmp.ne.s32.totalorder %s168, %s169
    %p183 = scmp.eq.s32.totalorder %s19, 7
    %p184 = por %p182, %p183
    %p186 = scmp.ne.s32.totalorder %s169, %s185
    %p187 = scmp.eq.s32.totalorder %s19, 0
    %p188 = por %p186, %p187
    %s189 = ssub.s32 %s23, %s34
    %p190 = scmp.eq.s32.totalorder %s189, 0
    %s192 = sadd.s32 %s191, 1
    %s193 = scalar_select %p190, %s191, %s192
    %p196 = pneg %p190
    %p197 = scmp.eq.s32.totalorder %s13, 7
    %p198 = por %p196, %p197
    %p199 = scmp.ne.s32.totalorder %s191, %s194
    %p200 = scmp.eq.s32.totalorder %s13, 0
    %p201 = por %p199, %p200
    %p202 = scmp.ne.s32.totalorder %s191, %s194
    %p203 = scmp.eq.s32.totalorder %s18, 7
    %p204 = por %p202, %p203
    %p205 = scmp.ne.s32.totalorder %s194, %s195
    %p206 = scmp.eq.s32.totalorder %s18, 0
    %p207 = por %p205, %p206
    %p208 = scmp.ne.s32.totalorder %s194, %s195
    %p209 = scmp.eq.s32.totalorder %s19, 7
    %p210 = por %p208, %p209
    %p212 = scmp.ne.s32.totalorder %s195, %s211
    %p213 = scmp.eq.s32.totalorder %s19, 0
    %p214 = por %p212, %p213
    %s215 = ssub.s32 %s23, %s34
    %p216 = scmp.eq.s32.totalorder %s215, 0
    %s218 = sadd.s32 %s217, 1
    %s219 = scalar_select %p216, %s217, %s218
    %p222 = pneg %p216
    %p223 = scmp.eq.s32.totalorder %s13, 7
    %p224 = por %p222, %p223
    %p225 = scmp.ne.s32.totalorder %s217, %s220
    %p226 = scmp.eq.s32.totalorder %s13, 0
    %p227 = por %p225, %p226
    %p228 = scmp.ne.s32.totalorder %s217, %s220
    %p229 = scmp.eq.s32.totalorder %s18, 7
    %p230 = por %p228, %p229
    %p231 = scmp.ne.s32.totalorder %s220, %s221
    %p232 = scmp.eq.s32.totalorder %s18, 0
    %p233 = por %p231, %p232
    %p234 = scmp.ne.s32.totalorder %s220, %s221
    %p235 = scmp.eq.s32.totalorder %s19, 7
    %p236 = por %p234, %p235
    %p238 = scmp.ne.s32.totalorder %s221, %s237
    %p239 = scmp.eq.s32.totalorder %s19, 0
    %p240 = por %p238, %p239
    %s241 = ssub.s32 %s20, %s46
    %s242 = ssub.s32 %s21, %s42
    %s243 = sor.u32 %s241, %s242
    %s244 = ssub.s32 %s22, %s38
    %s245 = sor.u32 %s243, %s244
    %p246 = scmp.eq.s32.totalorder %s245, 0
    %s248 = sadd.s32 %s247, 1
    %s249 = scalar_select %p246, %s247, %s248
    %p252 = pneg %p246
    %p253 = scmp.eq.s32.totalorder %s13, 7
    %p254 = por %p252, %p253
    %p255 = scmp.ne.s32.totalorder %s247, %s250
    %p256 = scmp.eq.s32.totalorder %s13, 0
    %p257 = por %p255, %p256
    %p258 = scmp.ne.s32.totalorder %s247, %s250
    %p259 = scmp.eq.s32.totalorder %s18, 7
    %p260 = por %p258, %p259
    %p261 = scmp.ne.s32.totalorder %s250, %s251
    %p262 = scmp.eq.s32.totalorder %s18, 0
    %p263 = por %p261, %p262
    %p264 = scmp.ne.s32.totalorder %s250, %s251
    %p265 = scmp.eq.s32.totalorder %s19, 7
    %p266 = por %p264, %p265
    %p268 = scmp.ne.s32.totalorder %s251, %s267
    %p269 = scmp.eq.s32.totalorder %s19, 0
    %p270 = por %p268, %p269
    %p271 = scmp.le.s32.totalorder 1, %s13
    %p272 = scmp.lt.s32.totalorder %s13, 9
    %p273 = pnand %p271, %p272
    %p274 = pneg %p273
    // Predicated region
    $region9: #{block_forward.5} parent=5 // pred_check
      _
    $region10: #{block_forward.5} parent=5 // pred_check_branch
      %276 = sbr.rel (%p273) target = $region12
    $region11: #{block_forward.5} parent=5 // pred_region
      %s277 = ssub.s32 %s13, 1
      // Predicated region
      $region13: #{block_forward.5} parent=11 // pred_check
        %p278 = pneg %p155
      $region14: #{block_forward.5} parent=11 // pred_check_branch
        %280 = sbr.rel (%p278) target = $region16
      $region15: #{block_forward.5} parent=11 // pred_region
        %p281 = scmp.lt.s32.totalorder %s26, 0
        %s282 = scalar_select %p281, %s26, 0
        %s283 = smul.addr %s282, 8
        %s284 = scalar_lea.vmem %s3, %s283
      $region16: #{block_forward.5} parent=11 // pred_fallthru
        _
      // Predicated region
      $region17: #{block_forward.5} parent=11 // pred_check
        %p285 = pneg %p181
      $region18: #{block_forward.5} parent=11 // pred_check_branch
        %287 = sbr.rel (%p285) target = $region20
      $region19: #{block_forward.5} parent=11 // pred_region
        %p288 = scmp.lt.s32.totalorder %s26, 0
        %s289 = scalar_select %p288, %s26, 0
        %s290 = smul.addr %s289, 8
        %s291 = scalar_lea.vmem %s4, %s290
      $region20: #{block_forward.5} parent=11 // pred_fallthru
        _
      // Predicated region
      $region21: #{block_forward.5} parent=11 // pred_check
        %p292 = pneg %p207
      $region22: #{block_forward.5} parent=11 // pred_check_branch
        %294 = sbr.rel (%p292) target = $region24
      $region23: #{block_forward.5} parent=11 // pred_region
        %p295 = scmp.lt.s32.totalorder %s27, 0
        %s296 = scalar_select %p295, %s27, 0
        %s297 = smul.addr %s296, 8
        %s298 = scalar_lea.vmem %s5, %s297
      $region24: #{block_forward.5} parent=11 // pred_fallthru
        _
      // Predicated region
      $region25: #{block_forward.5} parent=11 // pred_check
        %p299 = pneg %p233
      $region26: #{block_forward.5} parent=11 // pred_check_branch
        %301 = sbr.rel (%p299) target = $region28
      $region27: #{block_forward.5} parent=11 // pred_region
        %p302 = scmp.lt.s32.totalorder %s27, 0
        %s303 = scalar_select %p302, %s27, 0
        %s304 = smul.addr %s303, 8
        %s305 = scalar_lea.vmem %s6, %s304
      $region28: #{block_forward.5} parent=11 // pred_fallthru
        _
    $region12: #{block_forward.5} parent=5 // pred_fallthru
      _
    %p306 = scmp.lt.s32.totalorder %s13, 8
    // Predicated region
    $region29: #{block_forward.5} parent=5 // pred_check
      %p307 = pneg %p306
    $region30: #{block_forward.5} parent=5 // pred_check_branch
      %309 = sbr.rel (%p307) target = $region32
    $region31: #{block_forward.5} parent=5 // pred_region
      // Predicated region
      $region33: #{block_forward.5} parent=31 // pred_check
        %p310 = pneg %p63
      $region34: #{block_forward.5} parent=31 // pred_check_branch
        %312 = sbr.rel (%p310) target = $region36
      $region35: #{block_forward.5} parent=31 // pred_region
        %p313 = scmp.lt.s32.totalorder %s20, 1
        %s314 = scalar_select %p313, %s20, 1
        %p315 = scmp.lt.s32.totalorder %s21, 3
        %s316 = scalar_select %p315, %s21, 3
        %p317 = scmp.lt.s32.totalorder %s22, 0
        %s318 = scalar_select %p317, %s22, 0
        %s319 = sadd.s32 %s318, %s316
        %s320 = smul.addr %s314, 4
        %s321 = sadd.s32 %s319, %s320
        %s322 = smul.addr %s321, 4
        %s323 = scalar_lea.vmem %s0, %s322
      $region36: #{block_forward.5} parent=31 // pred_fallthru
        _
      // Predicated region
      $region37: #{block_forward.5} parent=31 // pred_check
        %p324 = pneg %p93
      $region38: #{block_forward.5} parent=31 // pred_check_branch
        %326 = sbr.rel (%p324) target = $region40
      $region39: #{block_forward.5} parent=31 // pred_region
        %p327 = scmp.lt.s32.totalorder %s20, 1
        %s328 = scalar_select %p327, %s20, 1
        %p329 = scmp.lt.s32.totalorder %s21, 3
        %s330 = scalar_select %p329, %s21, 3
        %p331 = scmp.lt.s32.totalorder %s23, 0
        %s332 = scalar_select %p331, %s23, 0
        %s333 = sadd.s32 %s332, %s330
        %s334 = smul.addr %s328, 4
        %s335 = sadd.s32 %s333, %s334
        %s336 = smul.addr %s335, 4
        %s337 = scalar_lea.vmem %s1, %s336
      $region40: #{block_forward.5} parent=31 // pred_fallthru
        _
      // Predicated region
      $region41: #{block_forward.5} parent=31 // pred_check
        %p338 = pneg %p123
      $region42: #{block_forward.5} parent=31 // pred_check_branch
        %340 = sbr.rel (%p338) target = $region44
      $region43: #{block_forward.5} parent=31 // pred_region
        %p341 = scmp.lt.s32.totalorder %s20, 1
        %s342 = scalar_select %p341, %s20, 1
        %p343 = scmp.lt.s32.totalorder %s21, 3
        %s344 = scalar_select %p343, %s21, 3
        %p345 = scmp.lt.s32.totalorder %s23, 0
        %s346 = scalar_select %p345, %s23, 0
        %s347 = sadd.s32 %s346, %s344
        %s348 = smul.addr %s342, 4
        %s349 = sadd.s32 %s347, %s348
        %s350 = smul.addr %s349, 4
        %s351 = scalar_lea.vmem %s2, %s350
      $region44: #{block_forward.5} parent=31 // pred_fallthru
        _
    $region32: #{block_forward.5} parent=5 // pred_fallthru
      _
    %p352 = scmp.le.s32.totalorder 1, %s13
    %p353 = scmp.lt.s32.totalorder %s13, 9
    %p354 = pnand %p352, %p353
    %p355 = pneg %p354
    // Predicated region
    $region45: #{block_forward.5} parent=5 // pred_check
      _
    $region46: #{block_forward.5} parent=5 // pred_check_branch
      %357 = sbr.rel (%p354) target = $region48
    $region47: #{block_forward.5} parent=5 // pred_region
      %s358 = ssub.s32 %s13, 1
      %p359 = scmp.lt.s32.totalorder %s24, 1
      %s360 = scalar_select %p359, %s24, 1
      %p361 = scmp.lt.s32.totalorder %s25, 3
      %s362 = scalar_select %p361, %s25, 3
      %p363 = scmp.lt.s32.totalorder %s26, 0
      %s364 = scalar_select %p363, %s26, 0
      %s365 = sadd.s32 %s364, %s362
      %s366 = smul.addr %s360, 4
      %s367 = sadd.s32 %s365, %s366
      %s368 = smul.addr %s367, 4
      %s369 = scalar_lea.vmem %s0, %s368
      %p370 = pneg %p69
      %p371 = pneg %p66
      %p372 = scmp.lt.s32.totalorder %s24, 1
      %s373 = scalar_select %p372, %s24, 1
      %p374 = scmp.lt.s32.totalorder %s25, 3
      %s375 = scalar_select %p374, %s25, 3
      %p376 = scmp.lt.s32.totalorder %s27, 0
      %s377 = scalar_select %p376, %s27, 0
      %s378 = sadd.s32 %s377, %s375
      %s379 = smul.addr %s373, 4
      %s380 = sadd.s32 %s378, %s379
      %s381 = smul.addr %s380, 4
      %s382 = scalar_lea.vmem %s1, %s381
      %p383 = pneg %p99
      %p384 = pneg %p96
      %p385 = scmp.lt.s32.totalorder %s24, 1
      %s386 = scalar_select %p385, %s24, 1
      %p387 = scmp.lt.s32.totalorder %s25, 3
      %s388 = scalar_select %p387, %s25, 3
      %p389 = scmp.lt.s32.totalorder %s27, 0
      %s390 = scalar_select %p389, %s27, 0
      %s391 = sadd.s32 %s390, %s388
      %s392 = smul.addr %s386, 4
      %s393 = sadd.s32 %s391, %s392
      %s394 = smul.addr %s393, 4
      %s395 = scalar_lea.vmem %s2, %s394
      %p396 = pneg %p129
      %p397 = pneg %p126
      %p398 = scmp.lt.s32.totalorder %s26, 0
      %s399 = scalar_select %p398, %s26, 0
      %s400 = smul.addr %s399, 8
      %s401 = scalar_lea.vmem %s3, %s400
      %p402 = pneg %p155
      %p403 = pneg %p152
      %p404 = scmp.lt.s32.totalorder %s26, 0
      %s405 = scalar_select %p404, %s26, 0
      %s406 = smul.addr %s405, 8
      %s407 = scalar_lea.vmem %s4, %s406
      %p408 = pneg %p181
      %p409 = pneg %p178
      %p410 = scmp.lt.s32.totalorder %s27, 0
      %s411 = scalar_select %p410, %s27, 0
      %s412 = smul.addr %s411, 8
      %s413 = scalar_lea.vmem %s5, %s412
      %p414 = pneg %p207
      %p415 = pneg %p204
      %p416 = scmp.lt.s32.totalorder %s27, 0
      %s417 = scalar_select %p416, %s27, 0
      %s418 = smul.addr %s417, 8
      %s419 = scalar_lea.vmem %s6, %s418
      %p420 = pneg %p233
      %p421 = pneg %p230
      %p422 = pneg %p263
      %p423 = pneg %p260
      %p424 = scmp.lt.s32.totalorder %s24, 1
      %s425 = scalar_select %p424, %s24, 1
      %p426 = scmp.lt.s32.totalorder %s25, 3
      %s427 = scalar_select %p426, %s25, 3
      %p428 = scmp.lt.s32.totalorder %s26, 0
      %s429 = scalar_select %p428, %s26, 0
      %s430 = sadd.s32 %s429, %s427
      %s431 = smul.addr %s425, 4
      %s432 = sadd.s32 %s430, %s431
      %s433 = smul.addr %s432, 4
      %s434 = scalar_lea.vmem %s7, %s433
      %p435 = scmp.lt.s32.totalorder %s24, 1
      %s436 = scalar_select %p435, %s24, 1
      %p437 = scmp.lt.s32.totalorder %s25, 3
      %s438 = scalar_select %p437, %s25, 3
      %p439 = scmp.lt.s32.totalorder %s26, 0
      %s440 = scalar_select %p439, %s26, 0
      %s441 = sadd.s32 %s440, %s438
      %s442 = smul.addr %s436, 4
      %s443 = sadd.s32 %s441, %s442
      %s444 = smul.addr %s443, 4
      %s445 = scalar_lea.vmem %s0, %s444
      %p446 = scmp.lt.s32.totalorder %s24, 1
      %s447 = scalar_select %p446, %s24, 1
      %p448 = scmp.lt.s32.totalorder %s25, 3
      %s449 = scalar_select %p448, %s25, 3
      %p450 = scmp.lt.s32.totalorder %s27, 0
      %s451 = scalar_select %p450, %s27, 0
      %s452 = sadd.s32 %s451, %s449
      %s453 = smul.addr %s447, 4
      %s454 = sadd.s32 %s452, %s453
      %s455 = smul.addr %s454, 4
      %s456 = scalar_lea.vmem %s1, %s455
      %p457 = scmp.lt.s32.totalorder %s24, 1
      %s458 = scalar_select %p457, %s24, 1
      %p459 = scmp.lt.s32.totalorder %s25, 3
      %s460 = scalar_select %p459, %s25, 3
      %p461 = scmp.lt.s32.totalorder %s27, 0
      %s462 = scalar_select %p461, %s27, 0
      %s463 = sadd.s32 %s462, %s460
      %s464 = smul.addr %s458, 4
      %s465 = sadd.s32 %s463, %s464
      %s466 = smul.addr %s465, 4
      %s467 = scalar_lea.vmem %s2, %s466
      %p468 = scmp.lt.s32.totalorder %s26, 0
      %s469 = scalar_select %p468, %s26, 0
      %s470 = smul.addr %s469, 8
      %s471 = scalar_lea.vmem %s3, %s470
      %p472 = scmp.lt.s32.totalorder %s26, 0
      %s473 = scalar_select %p472, %s26, 0
      %s474 = smul.addr %s473, 8
      %s475 = scalar_lea.vmem %s4, %s474
      %p476 = scmp.lt.s32.totalorder %s27, 0
      %s477 = scalar_select %p476, %s27, 0
      %s478 = smul.addr %s477, 8
      %s479 = scalar_lea.vmem %s5, %s478
      %p480 = scmp.lt.s32.totalorder %s27, 0
      %s481 = scalar_select %p480, %s27, 0
      %s482 = smul.addr %s481, 8
      %s483 = scalar_lea.vmem %s6, %s482
      %p484 = scmp.lt.s32.totalorder %s24, 1
      %s485 = scalar_select %p484, %s24, 1
      %p486 = scmp.lt.s32.totalorder %s25, 3
      %s487 = scalar_select %p486, %s25, 3
      %p488 = scmp.lt.s32.totalorder %s26, 0
      %s489 = scalar_select %p488, %s26, 0
      %s490 = sadd.s32 %s489, %s487
      %s491 = smul.addr %s485, 4
      %s492 = sadd.s32 %s490, %s491
      %s493 = smul.addr %s492, 4
      %s494 = scalar_lea.vmem %s7, %s493
      %s496 = smul.u32 %s26, 8
      %s497 = smul.u32 %s27, 8
      %p498 = scmp.eq.s32.totalorder %s27, 0
      // Predicated region
      $region49: #{block_forward.5} parent=47 // pred_check
        %p499 = pneg %p498
      $region50: #{block_forward.5} parent=47 // pred_check_branch
        %501 = sbr.rel (%p499) target = $region52
      $region51: #{block_forward.5} parent=47 // pred_region
        %vm502 = vcmask 7168
        %503 = vst.msk [vmem:[#allocation2] sm:$0xff] %vm502, -inf
        %504 = vst.msk [vmem:[#allocation3] sm:$0xff] %vm502, 0.0
        %vm505 = vcmask 64512
        %506 = vst.msk [vmem:[#allocation4] sm:$0xff] %vm505, 0.0
      $region52: #{block_forward.5} parent=47 // pred_fallthru
        _
      %s507 = sadd.s32 %s496, 7
      %p508 = scmp.le.s32.totalorder %s497, %s507
      // Predicated region
      $region53: #{block_forward.5} parent=47 // pred_check
        %p509 = pneg %p508
      $region54: #{block_forward.5} parent=47 // pred_check_branch
        %511 = sbr.rel (%p509) target = $region56
      $region55: #{block_forward.5} parent=47 // pred_region
        %v512 = vld [vmem:[%s445] sm:$0xf]
        %v513 = vunpack.c.l.bf16 %v512
        %v514 = vld [vmem:[%s456] sm:$0xf]
        %v515 = vunpack.c.l.bf16 %v514
        %v516 = vld [vmem:[%s471] sm:$0xff]
        %v517 = vld [vmem:[%s475] sm:$0xff]
        %v518 = vld [vmem:[%s479] sm:$0xff]
        %v519 = vld [vmem:[%s483] sm:$0xff]
        %v520 = vmul.f32 %v513, %v516
        %522 = vrot.lane.b32.xlu0 %v517, 4
        %v523 = vpop.permute.xlu0 %522
        %v525 = vmul.f32 %v513, %v523
        %527 = vrot.lane.b32.xlu0 %v525, 124
        %v528 = vpop.permute.xlu0 %527
        %v530 = vsub.f32 %v520, %v528
        %v531 = vpack.c.bf16 %v530, %v530
        %533 = vrot.lane.b32.xlu0 %v516, 4
        %v534 = vpop.permute.xlu0 %533
        %v536 = vmul.f32 %v513, %v534
        %v537 = vmul.f32 %v513, %v517
        %539 = vrot.lane.b32.xlu0 %v537, 4
        %v540 = vpop.permute.xlu0 %539
        %v542 = vadd.f32 %v536, %v540
        %v543 = vpack.c.bf16 %v542, %v542
        %v544 = vmul.f32 %v515, %v518
        %546 = vrot.lane.b32.xlu0 %v519, 4
        %v547 = vpop.permute.xlu0 %546
        %v549 = vmul.f32 %v515, %v547
        %551 = vrot.lane.b32.xlu0 %v549, 124
        %v552 = vpop.permute.xlu0 %551
        %v554 = vsub.f32 %v544, %v552
        %v555 = vpack.c.bf16 %v554, %v554
        %557 = vrot.lane.b32.xlu0 %v518, 4
        %v558 = vpop.permute.xlu0 %557
        %v560 = vmul.f32 %v515, %v558
        %v561 = vmul.f32 %v515, %v519
        %563 = vrot.lane.b32.xlu0 %v561, 4
        %v564 = vpop.permute.xlu0 %563
        %v566 = vadd.f32 %v560, %v564
        %v567 = vpack.c.bf16 %v566, %v566
        %569 = vrot.lane.b32.xlu0 %v543, 124
        %v570 = vpop.permute.xlu0 %569
        %572 = vrot.lane.b32.xlu0 %v567, 124
        %v573 = vpop.permute.xlu0 %572
        %vm574 = vcmask 31744
        %v576 = vsel %vm574, %v570, 0
        %v579 = vsel %vm574, %v573, 0
        %581 = vmatprep.subr.bf16.mxu0 0
        %582 = vmatpush1.bf16.xpose.msra.mxu0 0
        %583 = vmatprep.subr.bf16.mxu0 0
        %584 = vmatpush1.bf16.xpose.msra.mxu0 0
        %585 = vmatprep.subr.bf16.mxu0 0
        %586 = vmatpush1.bf16.xpose.msra.mxu0 0
        %587 = vmatprep.subr.bf16.mxu0 0
        %588 = vmatpush1.bf16.xpose.msra.mxu0 0
        %589 = vmatprep.subr.bf16.mxu0 0
        %590 = vmatpush1.bf16.xpose.msra.mxu0 0
        %591 = vmatprep.subr.bf16.mxu0 0
        %592 = vmatpush1.bf16.xpose.msra.mxu0 0
        %593 = vmatprep.subr.bf16.mxu0 0
        %594 = vmatpush1.bf16.xpose.msra.mxu0 0
        %595 = vmatprep.subr.bf16.mxu0 0
        %596 = vmatpush1.bf16.xpose.msra.mxu0 %v579
        %597 = vmatprep.subr.bf16.mxu0 0
        %598 = vmatpush2.bf16.xpose.msra.mxu0 0
        %599 = vmatprep.subr.bf16.mxu0 0
        %600 = vmatpush2.bf16.xpose.msra.mxu0 0
        %601 = vmatprep.subr.bf16.mxu0 0
        %602 = vmatpush2.bf16.xpose.msra.mxu0 0
        %603 = vmatprep.subr.bf16.mxu0 0
        %604 = vmatpush2.bf16.xpose.msra.mxu0 0
        %605 = vmatprep.subr.bf16.mxu0 0
        %606 = vmatpush2.bf16.xpose.msra.mxu0 0
        %607 = vmatprep.subr.bf16.mxu0 0
        %608 = vmatpush2.bf16.xpose.msra.mxu0 0
        %609 = vmatprep.subr.bf16.mxu0 0
        %610 = vmatpush2.bf16.xpose.msra.mxu0 0
        %611 = vmatprep.subr.bf16.mxu0 0
        %612 = vmatpush2.bf16.xpose.msra.mxu0 0
        %613 = vmatprep.mubr.bf16.mxu0 0
        %614 = vmatmul.mubr.bf16.gmra.mxu0 %v576
        %v615 = vpop.f32.mrf.mxu0
        %v616 = vadd.f32 0.0, %v615
        %v617 = vpop.f32.mrf.mxu0
        %v618 = vpop.f32.mrf.mxu0
        %v619 = vpop.f32.mrf.mxu0
        %620 = vdwg.mxu0
        %v622 = vsel %vm574, %v531, 0
        %v625 = vsel %vm574, %v555, 0
        %627 = vmatprep.subr.bf16.mxu0 0
        %628 = vmatpush1.bf16.xpose.msra.mxu0 0
        %629 = vmatprep.subr.bf16.mxu0 0
        %630 = vmatpush1.bf16.xpose.msra.mxu0 0
        %631 = vmatprep.subr.bf16.mxu0 0
        %632 = vmatpush1.bf16.xpose.msra.mxu0 0
        %633 = vmatprep.subr.bf16.mxu0 0
        %634 = vmatpush1.bf16.xpose.msra.mxu0 0
        %635 = vmatprep.subr.bf16.mxu0 0
        %636 = vmatpush1.bf16.xpose.msra.mxu0 0
        %637 = vmatprep.subr.bf16.mxu0 0
        %638 = vmatpush1.bf16.xpose.msra.mxu0 0
        %639 = vmatprep.subr.bf16.mxu0 0
        %640 = vmatpush1.bf16.xpose.msra.mxu0 0
        %641 = vmatprep.subr.bf16.mxu0 0
        %642 = vmatpush1.bf16.xpose.msra.mxu0 %v625
        %643 = vmatprep.subr.bf16.mxu0 0
        %644 = vmatpush2.bf16.xpose.msra.mxu0 0
        %645 = vmatprep.subr.bf16.mxu0 0
        %646 = vmatpush2.bf16.xpose.msra.mxu0 0
        %647 = vmatprep.subr.bf16.mxu0 0
        %648 = vmatpush2.bf16.xpose.msra.mxu0 0
        %649 = vmatprep.subr.bf16.mxu0 0
        %650 = vmatpush2.bf16.xpose.msra.mxu0 0
        %651 = vmatprep.subr.bf16.mxu0 0
        %652 = vmatpush2.bf16.xpose.msra.mxu0 0
        %653 = vmatprep.subr.bf16.mxu0 0
        %654 = vmatpush2.bf16.xpose.msra.mxu0 0
        %655 = vmatprep.subr.bf16.mxu0 0
        %656 = vmatpush2.bf16.xpose.msra.mxu0 0
        %657 = vmatprep.subr.bf16.mxu0 0
        %658 = vmatpush2.bf16.xpose.msra.mxu0 0
        %659 = vmatprep.mubr.bf16.mxu0 0
        %660 = vmatmul.mubr.bf16.gmra.mxu0 %v622
        %v661 = vpop.f32.mrf.mxu0
        %v662 = vadd.f32 %v616, %v661
        %v663 = vpop.f32.mrf.mxu0
        %v664 = vpop.f32.mrf.mxu0
        %v665 = vpop.f32.mrf.mxu0
        %666 = vdwg.mxu0
        %v667 = vmul.f32 %v662, 0.35355338
        %v668 = vlaneseq
        %v669 = vshrl.u32 %v668, 7
        %v670 = vstv %s496
        %v671 = vadd.s32 %v670, %v669
        %v672 = vlaneseq
        %v673 = vand.u32 %v672, 127
        %v674 = vstv %s497
        %v675 = vadd.s32 %v674, %v673
        %vm676 = vcmp.ge.s32.totalorder %v671, %v675
        %v677 = vsel %vm676, %v667, -1e+30
        %v678 = vld [vmem:[#allocation2] sm:$0xff]
        %vm679 = vcmask 64512
        %v680 = vsel %vm679, %v677, -inf
        %681 = vmax.xlane.f32.xlu0 %v680
        %v682 = vpop.xlane.xlu0 %681
        %v683 = vmax.f32 %v678, %v682
        %v684 = vsub.f32 %v678, %v683
        %v685 = vmul.f32 %v684, 1.442695
        %v686 = vpow.pop %v685
        %688 = vset.pattern.permute.xlu0 0
        %689 = vperm.xlu0 %688, %v683
        %v690 = vpop.permute.xlu0 %689
        %v692 = vsub.f32 %v677, %v690
        %v693 = vmul.f32 %v692, 1.442695
        %v694 = vpow.pop %v693
        %v695 = vld [vmem:[#allocation3] sm:$0xff]
        %v696 = vmul.f32 %v686, %v695
        %v697 = vsel %vm679, %v694, 0.0
        %698 = vadd.xlane.f32.xlu0 %v697
        %v699 = vpop.xlane.xlu0 %698
        %v700 = vadd.f32 %v696, %v699
        %vm701 = vcmask 7168
        %702 = vst.msk [vmem:[#allocation3] sm:$0xff] %vm701, %v700
        %v703 = vld [vmem:[#allocation4] sm:$0xff]
        %705 = vset.pattern.permute.xlu0 0
        %706 = vperm.xlu0 %705, %v686
        %v707 = vpop.permute.xlu0 %706
        %v709 = vmul.f32 %v707, %v703
        %v710 = vpack.c.bf16 %v694, %v694
        %v711 = vld [vmem:[%s467] sm:$0xf]
        %v713 = vsel %vm679, %v710, 0
        %vm715 = vcmask 1043456
        %v717 = vsel %vm715, %v711, 0
        %719 = vmatprep.subr.bf16.mxu0 0
        %720 = vmatpush1.bf16.msra.mxu0 0
        %721 = vmatprep.subr.bf16.mxu0 0
        %722 = vmatpush1.bf16.msra.mxu0 0
        %723 = vmatprep.subr.bf16.mxu0 0
        %724 = vmatpush1.bf16.msra.mxu0 0
        %725 = vmatprep.subr.bf16.mxu0 0
        %726 = vmatpush1.bf16.msra.mxu0 0
        %727 = vmatprep.subr.bf16.mxu0 0
        %728 = vmatpush1.bf16.msra.mxu0 0
        %729 = vmatprep.subr.bf16.mxu0 0
        %730 = vmatpush1.bf16.msra.mxu0 0
        %731 = vmatprep.subr.bf16.mxu0 0
        %732 = vmatpush1.bf16.msra.mxu0 0
        %733 = vmatprep.subr.bf16.mxu0 0
        %734 = vmatpush1.bf16.msra.mxu0 %v717
        %735 = vmatprep.subr.bf16.mxu0 0
        %736 = vmatpush2.bf16.msra.mxu0 0
        %737 = vmatprep.subr.bf16.mxu0 0
        %738 = vmatpush2.bf16.msra.mxu0 0
        %739 = vmatprep.subr.bf16.mxu0 0
        %740 = vmatpush2.bf16.msra.mxu0 0
        %741 = vmatprep.subr.bf16.mxu0 0
        %742 = vmatpush2.bf16.msra.mxu0 0
        %743 = vmatprep.subr.bf16.mxu0 0
        %744 = vmatpush2.bf16.msra.mxu0 0
        %745 = vmatprep.subr.bf16.mxu0 0
        %746 = vmatpush2.bf16.msra.mxu0 0
        %747 = vmatprep.subr.bf16.mxu0 0
        %748 = vmatpush2.bf16.msra.mxu0 0
        %749 = vmatprep.subr.bf16.mxu0 0
        %750 = vmatpush2.bf16.msra.mxu0 0
        %751 = vmatprep.mubr.bf16.mxu0 0
        %752 = vmatmul.mubr.bf16.gmra.mxu0 %v713
        %v753 = vpop.f32.mrf.mxu0
        %v754 = vadd.f32 0.0, %v753
        %v755 = vpop.f32.mrf.mxu0
        %v756 = vpop.f32.mrf.mxu0
        %v757 = vpop.f32.mrf.mxu0
        %758 = vdwg.mxu0
        %v759 = vadd.f32 %v709, %v754
        %760 = vst.msk [vmem:[#allocation4] sm:$0xff] %vm679, %v759
        %761 = vst.msk [vmem:[#allocation2] sm:$0xff] %vm701, %v683
      $region56: #{block_forward.5} parent=47 // pred_fallthru
        _
      // Predicated region
      $region57: #{block_forward.5} parent=47 // pred_check
        %p762 = pneg %p498
      $region58: #{block_forward.5} parent=47 // pred_check_branch
        %764 = sbr.rel (%p762) target = $region60
      $region59: #{block_forward.5} parent=47 // pred_region
        %v765 = vld [vmem:[#allocation4] sm:$0xff]
        %v766 = vld [vmem:[#allocation3] sm:$0xff]
        %v767 = vrcp.pop %v766
        %769 = vset.pattern.permute.xlu0 0
        %770 = vperm.xlu0 %769, %v767
        %v771 = vpop.permute.xlu0 %770
        %v773 = vmul.f32 %v765, %v771
        %v774 = vpack.c.bf16 %v773, %v773
        %vm775 = vcmask 60416
        %776 = vst.msk [vmem:[%s494] sm:$0xf] %vm775, %v774
      $region60: #{block_forward.5} parent=47 // pred_fallthru
        _
      %p777 = scmp.lt.s32.totalorder %s24, 1
      %s778 = scalar_select %p777, %s24, 1
      %p779 = scmp.lt.s32.totalorder %s25, 3
      %s780 = scalar_select %p779, %s25, 3
      %p781 = scmp.lt.s32.totalorder %s26, 0
      %s782 = scalar_select %p781, %s26, 0
      %s783 = sadd.s32 %s782, %s780
      %s784 = smul.addr %s778, 4
      %s785 = sadd.s32 %s783, %s784
      %s786 = smul.addr %s785, 4
      %s787 = scalar_lea.vmem %s7, %s786
      // Predicated region
      $region61: #{block_forward.5} parent=47 // pred_check
        %p788 = pneg %p260
      $region62: #{block_forward.5} parent=47 // pred_check_branch
        %790 = sbr.rel (%p788) target = $region64
      $region63: #{block_forward.5} parent=47 // pred_region
        _
      $region64: #{block_forward.5} parent=47 // pred_fallthru
        _
    $region48: #{block_forward.5} parent=5 // pred_fallthru
      _
    %p791 = scmp.le.s32.totalorder 2, %s13
    // Predicated region
    $region65: #{block_forward.5} parent=5 // pred_check
      %p792 = pneg %p791
    $region66: #{block_forward.5} parent=5 // pred_check_branch
      %794 = sbr.rel (%p792) target = $region68
    $region67: #{block_forward.5} parent=5 // pred_region
      %s795 = ssub.s32 %s13, 2
      // Predicated region
      $region69: #{block_forward.5} parent=67 // pred_check
        %p796 = pneg %p266
      $region70: #{block_forward.5} parent=67 // pred_check_branch
        %798 = sbr.rel (%p796) target = $region72
      $region71: #{block_forward.5} parent=67 // pred_region
        %p799 = scmp.lt.s32.totalorder %s28, 1
        %s800 = scalar_select %p799, %s28, 1
        %p801 = scmp.lt.s32.totalorder %s29, 3
        %s802 = scalar_select %p801, %s29, 3
        %p803 = scmp.lt.s32.totalorder %s30, 0
        %s804 = scalar_select %p803, %s30, 0
        %s805 = sadd.s32 %s804, %s802
        %s806 = smul.addr %s800, 4
        %s807 = sadd.s32 %s805, %s806
        %s808 = smul.addr %s807, 4
        %s809 = scalar_lea.vmem %s7, %s808
      $region72: #{block_forward.5} parent=67 // pred_fallthru
        _
    $region68: #{block_forward.5} parent=5 // pred_fallthru
      _
  $region6: #{block_forward.5} parent=0 // loop_footer
    %s17 = sadd.s32 1, %s13
  $region7: #{block_forward.5} parent=0 // loop_footer_branch
    %12 = sbr.rel target = $region3
  $region8: #{block_forward.5} parent=0 // loop_exit
    _

// kernel: block_forward.6
$region0: #{block_forward.6}
  #allocation0 [shape = 'u32[]', space=smem, size = 0x4, offset = 0x4, fixed_abs, tag = 'smem constant byte address 0x4 - core index']
  #allocation1 [shape = 'u32[144,128]{1,0:T(1,128)}', space=vmem, size = 0x12000, scoped, tag = 'internal scratch']
  %s0 = inlined_call_operand.vmem [shape: f32[16,32], index: 0, kind: input, shape index: {}]
  %s1 = inlined_call_operand.vmem [shape: bf16[16,32], index: 1, kind: input, shape index: {}]
  %s2 = inlined_call_operand.vmem [shape: bf16[32,32], index: 2, kind: input, shape index: {}]
  %s3 = inlined_call_operand.vmem [shape: f32[16,32], index: 3, kind: output, shape index: {}]
  %s4 = sld [smem:[#allocation0]]
  $region22: #{block_forward.6} parent=0
    _
  %s6 = ssub.s32 1, %s4
  %s7 = scalar_select 0, %s6, %s4
  // Predicated region
  $region2: #{block_forward.6} parent=0 // pred_check
    _
  $region3: #{block_forward.6} parent=0 // pred_check_branch
    %9 = sbr.rel (0) target = $region5
  $region4: #{block_forward.6} parent=0 // pred_region
    _
  $region5: #{block_forward.6} parent=0 // pred_fallthru
    _
  // Predicated region
  $region6: #{block_forward.6} parent=0 // pred_check
    _
  $region7: #{block_forward.6} parent=0 // pred_check_branch
    %11 = sbr.rel (0) target = $region9
  $region8: #{block_forward.6} parent=0 // pred_region
    _
  $region9: #{block_forward.6} parent=0 // pred_fallthru
    _
  // Predicated region
  $region10: #{block_forward.6} parent=0 // pred_check
    _
  $region11: #{block_forward.6} parent=0 // pred_check_branch
    %13 = sbr.rel (0) target = $region13
  $region12: #{block_forward.6} parent=0 // pred_region
    _
  $region13: #{block_forward.6} parent=0 // pred_fallthru
    _
  %v15 = vld [vmem:[%s0] sm:$0xff]
  %v16 = vld [vmem:[%s0 + $0x8] sm:$0xff]
  %v17 = vld [vmem:[%s1] sm:$0xf]
  %v18 = vld [vmem:[%s1 + $0x4] sm:$0xf]
  %v19 = vld [vmem:[%s2] sm:$0xf]
  %v20 = vld [vmem:[%s2 + $0x4] sm:$0xf]
  %v21 = vld [vmem:[%s2 + $0x8] sm:$0xf]
  %v22 = vld [vmem:[%s2 + $0xc] sm:$0xf]
  %v25 = vunpack.c.l.b16 %v17
  %v26 = vunpack.c.l.b16 %v18
  %v27 = vpack.c.b16 %v26, %v25
  %v32 = vunpack.c.l.b16 %v19
  %v33 = vunpack.c.l.b16 %v20
  %v34 = vunpack.c.l.b16 %v21
  %v35 = vunpack.c.l.b16 %v22
  %v36 = vpack.c.b16 %v33, %v32
  %v37 = vpack.c.b16 %v35, %v34
  %vm40 = vcmask 261120
  %v42 = vsel %vm40, %v27, 0
  %44 = vmatprep.subr.bf16.mxu0 0
  %45 = vmatpush1.bf16.msra.mxu0 0
  %46 = vmatprep.subr.bf16.mxu0 0
  %47 = vmatpush1.bf16.msra.mxu0 0
  %48 = vmatprep.subr.bf16.mxu0 0
  %49 = vmatpush1.bf16.msra.mxu0 0
  %50 = vmatprep.subr.bf16.mxu0 0
  %51 = vmatpush1.bf16.msra.mxu0 0
  %52 = vmatprep.subr.bf16.mxu0 0
  %53 = vmatpush1.bf16.msra.mxu0 0
  %54 = vmatprep.subr.bf16.mxu0 0
  %55 = vmatpush1.bf16.msra.mxu0 0
  %56 = vmatprep.subr.bf16.mxu0 0
  %57 = vmatpush1.bf16.msra.mxu0 %v37
  %58 = vmatprep.subr.bf16.mxu0 0
  %59 = vmatpush1.bf16.msra.mxu0 %v36
  %60 = vmatprep.subr.bf16.mxu0 0
  %61 = vmatpush2.bf16.msra.mxu0 0
  %62 = vmatprep.subr.bf16.mxu0 0
  %63 = vmatpush2.bf16.msra.mxu0 0
  %64 = vmatprep.subr.bf16.mxu0 0
  %65 = vmatpush2.bf16.msra.mxu0 0
  %66 = vmatprep.subr.bf16.mxu0 0
  %67 = vmatpush2.bf16.msra.mxu0 0
  %68 = vmatprep.subr.bf16.mxu0 0
  %69 = vmatpush2.bf16.msra.mxu0 0
  %70 = vmatprep.subr.bf16.mxu0 0
  %71 = vmatpush2.bf16.msra.mxu0 0
  %72 = vmatprep.subr.bf16.mxu0 0
  %73 = vmatpush2.bf16.msra.mxu0 0
  %74 = vmatprep.subr.bf16.mxu0 0
  %75 = vmatpush2.bf16.msra.mxu0 0
  %76 = vmatprep.mubr.bf16.mxu0 0
  %77 = vmatmul.mubr.bf16.gmra.mxu0 %v42
  %v78 = vpop.f32.mrf.mxu0
  %v79 = vadd.f32 0.0, %v78
  %v80 = vpop.f32.mrf.mxu0
  %v81 = vpop.f32.mrf.mxu0
  %v82 = vadd.f32 0.0, %v81
  %v83 = vpop.f32.mrf.mxu0
  %84 = vdwg.mxu0
  %v85 = vadd.f32 %v15, %v79
  %v86 = vadd.f32 %v16, %v82
  %87 = vst.msk [vmem:[%s3] sm:$0xff] %vm40, %v85
  %88 = vst.msk [vmem:[%s3 + $0x8] sm:$0xff] %vm40, %v86
  // Predicated region
  $region14: #{block_forward.6} parent=0 // pred_check
    _
  $region15: #{block_forward.6} parent=0 // pred_check_branch
    %90 = sbr.rel (0) target = $region17
  $region16: #{block_forward.6} parent=0 // pred_region
    _
  $region17: #{block_forward.6} parent=0 // pred_fallthru
    _
  // Predicated region
  $region18: #{block_forward.6} parent=0 // pred_check
    _
  $region19: #{block_forward.6} parent=0 // pred_check_branch
    %92 = sbr.rel (0) target = $region21
  $region20: #{block_forward.6} parent=0 // pred_region
    _
  $region21: #{block_forward.6} parent=0 // pred_fallthru
    _

// kernel: block_forward.7
$region0: #{block_forward.7}
  #allocation0 [shape = 'u32[]', space=smem, size = 0x4, offset = 0x4, fixed_abs, tag = 'smem constant byte address 0x4 - core index']
  #allocation1 [shape = 'u32[144,128]{1,0:T(1,128)}', space=vmem, size = 0x12000, scoped, tag = 'internal scratch']
  %s0 = inlined_call_operand.vmem [shape: f32[16,32], index: 0, kind: input, shape index: {}]
  %s1 = inlined_call_operand.vmem [shape: f32[1,32], index: 1, kind: input, shape index: {}]
  %s2 = inlined_call_operand.vmem [shape: bf16[32,256], index: 2, kind: input, shape index: {}]
  %s3 = inlined_call_operand.vmem [shape: bf16[32,256], index: 3, kind: input, shape index: {}]
  %s4 = inlined_call_operand.vmem [shape: bf16[256,32], index: 4, kind: input, shape index: {}]
  %s5 = inlined_call_operand.hbm [shape: f32[16,32], index: 5, kind: output, shape index: {}]
  %s6 = sld [smem:[#allocation0]]
  $region34: #{block_forward.7} parent=0
    _
  %s8 = ssub.s32 1, %s6
  %s9 = scalar_select 0, %s8, %s6
  $region1: #{block_forward.7} parent=0
    #allocation2 [shape = 'u8[8192]{0}', space=vmem, size = 0x2000, scoped, tag = 'output window, operand 0, single buffered']
    #allocation3 [shape = 's32[1]{0}', space=sflag, size = 0x4, scoped, tag = 'scoped memory for block_forward.7']
    %10 = vsyncpa [#allocation3], 0
    // Predicated region
    $region2: #{block_forward.7} parent=1 // pred_check
      _
    $region3: #{block_forward.7} parent=1 // pred_check_branch
      %12 = sbr.rel (0) target = $region5
    $region4: #{block_forward.7} parent=1 // pred_region
      _
    $region5: #{block_forward.7} parent=1 // pred_fallthru
      _
    // Predicated region
    $region6: #{block_forward.7} parent=1 // pred_check
      _
    $region7: #{block_forward.7} parent=1 // pred_check_branch
      %14 = sbr.rel (0) target = $region9
    $region8: #{block_forward.7} parent=1 // pred_region
      _
    $region9: #{block_forward.7} parent=1 // pred_fallthru
      _
    // Predicated region
    $region10: #{block_forward.7} parent=1 // pred_check
      _
    $region11: #{block_forward.7} parent=1 // pred_check_branch
      %16 = sbr.rel (0) target = $region13
    $region12: #{block_forward.7} parent=1 // pred_region
      _
    $region13: #{block_forward.7} parent=1 // pred_fallthru
      _
    // Predicated region
    $region14: #{block_forward.7} parent=1 // pred_check
      _
    $region15: #{block_forward.7} parent=1 // pred_check_branch
      %18 = sbr.rel (0) target = $region17
    $region16: #{block_forward.7} parent=1 // pred_region
      _
    $region17: #{block_forward.7} parent=1 // pred_fallthru
      _
    // Predicated region
    $region18: #{block_forward.7} parent=1 // pred_check
      _
    $region19: #{block_forward.7} parent=1 // pred_check_branch
      %20 = sbr.rel (0) target = $region21
    $region20: #{block_forward.7} parent=1 // pred_region
      _
    $region21: #{block_forward.7} parent=1 // pred_fallthru
      _
    %p22 = scmp.eq.s32.totalorder 0, 0
    // Predicated region
    $region22: #{block_forward.7} parent=1 // pred_check
      %p23 = pneg %p22
    $region23: #{block_forward.7} parent=1 // pred_check_branch
      %25 = sbr.rel (%p23) target = $region25
    $region24: #{block_forward.7} parent=1 // pred_region
      %v26 = vld [vmem:[%s0] sm:$0xff]
      %v27 = vld [vmem:[%s0 + $0x8] sm:$0xff]
      %vm28 = vcmask 261120
      %29 = vst.msk [vmem:[#allocation2] sm:$0xff] %vm28, %v26
      %30 = vst.msk [vmem:[#allocation2 + $0x8] sm:$0xff] %vm28, %v27
    $region25: #{block_forward.7} parent=1 // pred_fallthru
      _
    %v31 = vld [vmem:[%s0] sm:$0xff]
    %v32 = vld [vmem:[%s0 + $0x8] sm:$0xff]
    %v33 = vmul.f32 %v31, %v31
    %v34 = vmul.f32 %v32, %v32
    %vm35 = vcmask 261120
    %v36 = vsel %vm35, %v33, 0.0
    %37 = vadd.xlane.f32.xlu0 %v36
    %v38 = vpop.xlane.xlu0 %37
    %v39 = vsel %vm35, %v34, 0.0
    %40 = vadd.xlane.f32.xlu0 %v39
    %v41 = vpop.xlane.xlu0 %40
    %v42 = vrcp.pop 32.0
    %v43 = vmul.f32 %v38, %v42
    %v44 = vmul.f32 %v41, %v42
    %v45 = vadd.f32 %v43, 1e-06
    %v46 = vadd.f32 %v44, 1e-06
    %v47 = vrsqrt.pop %v45
    %v48 = vrsqrt.pop %v46
    %v49 = vmul.f32 %v31, %v47
    %v50 = vmul.f32 %v32, %v48
    %v51 = vld [vmem:[%s1] sm:$0x1]
    %v53 = vlaneseq
    %v54 = vshrl.u32 %v53, 7
    %v55 = vsub.s32 0, %v54
    %v56 = vrot.slane %v51, %v55
    %v58 = vmul.f32 %v49, %v56
    %v59 = vmul.f32 %v50, %v56
    %v60 = vpack.c.bf16 %v59, %v58
    %v61 = vld [vmem:[%s2] sm:$0xff]
    %v62 = vld [vmem:[%s2 + $0x8] sm:$0xff]
    %v63 = vld [vmem:[%s2 + $0x10] sm:$0xff]
    %v64 = vld [vmem:[%s2 + $0x18] sm:$0xff]
    %v69 = vunpack.c.l.b16 %v61
    %v70 = vunpack.c.h.b16 %v61
    %v71 = vunpack.c.l.b16 %v62
    %v72 = vunpack.c.h.b16 %v62
    %v73 = vunpack.c.l.b16 %v63
    %v74 = vunpack.c.h.b16 %v63
    %v75 = vunpack.c.l.b16 %v64
    %v76 = vunpack.c.h.b16 %v64
    %v77 = vpack.c.b16 %v71, %v69
    %v78 = vpack.c.b16 %v72, %v70
    %v79 = vpack.c.b16 %v75, %v73
    %v80 = vpack.c.b16 %v76, %v74
    %v86 = vsel %vm35, %v60, 0
    %88 = vmatprep.subr.bf16.mxu0 0
    %89 = vmatpush1.bf16.msra.mxu0 0
    %90 = vmatprep.subr.bf16.mxu0 0
    %91 = vmatpush1.bf16.msra.mxu0 0
    %92 = vmatprep.subr.bf16.mxu0 0
    %93 = vmatpush1.bf16.msra.mxu0 0
    %94 = vmatprep.subr.bf16.mxu0 0
    %95 = vmatpush1.bf16.msra.mxu0 0
    %96 = vmatprep.subr.bf16.mxu0 0
    %97 = vmatpush1.bf16.msra.mxu0 0
    %98 = vmatprep.subr.bf16.mxu0 0
    %99 = vmatpush1.bf16.msra.mxu0 0
    %100 = vmatprep.subr.bf16.mxu0 %v80
    %101 = vmatpush1.bf16.msra.mxu0 %v79
    %102 = vmatprep.subr.bf16.mxu0 %v78
    %103 = vmatpush1.bf16.msra.mxu0 %v77
    %104 = vmatprep.subr.bf16.mxu0 0
    %105 = vmatpush2.bf16.msra.mxu0 0
    %106 = vmatprep.subr.bf16.mxu0 0
    %107 = vmatpush2.bf16.msra.mxu0 0
    %108 = vmatprep.subr.bf16.mxu0 0
    %109 = vmatpush2.bf16.msra.mxu0 0
    %110 = vmatprep.subr.bf16.mxu0 0
    %111 = vmatpush2.bf16.msra.mxu0 0
    %112 = vmatprep.subr.bf16.mxu0 0
    %113 = vmatpush2.bf16.msra.mxu0 0
    %114 = vmatprep.subr.bf16.mxu0 0
    %115 = vmatpush2.bf16.msra.mxu0 0
    %116 = vmatprep.subr.bf16.mxu0 0
    %117 = vmatpush2.bf16.msra.mxu0 0
    %118 = vmatprep.subr.bf16.mxu0 0
    %119 = vmatpush2.bf16.msra.mxu0 0
    %120 = vmatprep.mubr.bf16.mxu0 0
    %121 = vmatmul.mubr.bf16.gmra.mxu0 %v86
    %v122 = vpop.f32.mrf.mxu0
    %v123 = vadd.f32 0.0, %v122
    %v124 = vpop.f32.mrf.mxu0
    %v125 = vadd.f32 0.0, %v124
    %v126 = vpop.f32.mrf.mxu0
    %v127 = vadd.f32 0.0, %v126
    %v128 = vpop.f32.mrf.mxu0
    %v129 = vadd.f32 0.0, %v128
    %130 = vdwg.mxu0
    %v131 = vld [vmem:[%s3] sm:$0xff]
    %v132 = vld [vmem:[%s3 + $0x8] sm:$0xff]
    %v133 = vld [vmem:[%s3 + $0x10] sm:$0xff]
    %v134 = vld [vmem:[%s3 + $0x18] sm:$0xff]
    %v139 = vunpack.c.l.b16 %v131
    %v140 = vunpack.c.h.b16 %v131
    %v141 = vunpack.c.l.b16 %v132
    %v142 = vunpack.c.h.b16 %v132
    %v143 = vunpack.c.l.b16 %v133
    %v144 = vunpack.c.h.b16 %v133
    %v145 = vunpack.c.l.b16 %v134
    %v146 = vunpack.c.h.b16 %v134
    %v147 = vpack.c.b16 %v141, %v139
    %v148 = vpack.c.b16 %v142, %v140
    %v149 = vpack.c.b16 %v145, %v143
    %v150 = vpack.c.b16 %v146, %v144
    %155 = vmatprep.subr.bf16.mxu0 0
    %156 = vmatpush1.bf16.msra.mxu0 0
    %157 = vmatprep.subr.bf16.mxu0 0
    %158 = vmatpush1.bf16.msra.mxu0 0
    %159 = vmatprep.subr.bf16.mxu0 0
    %160 = vmatpush1.bf16.msra.mxu0 0
    %161 = vmatprep.subr.bf16.mxu0 0
    %162 = vmatpush1.bf16.msra.mxu0 0
    %163 = vmatprep.subr.bf16.mxu0 0
    %164 = vmatpush1.bf16.msra.mxu0 0
    %165 = vmatprep.subr.bf16.mxu0 0
    %166 = vmatpush1.bf16.msra.mxu0 0
    %167 = vmatprep.subr.bf16.mxu0 %v150
    %168 = vmatpush1.bf16.msra.mxu0 %v149
    %169 = vmatprep.subr.bf16.mxu0 %v148
    %170 = vmatpush1.bf16.msra.mxu0 %v147
    %171 = vmatprep.subr.bf16.mxu0 0
    %172 = vmatpush2.bf16.msra.mxu0 0
    %173 = vmatprep.subr.bf16.mxu0 0
    %174 = vmatpush2.bf16.msra.mxu0 0
    %175 = vmatprep.subr.bf16.mxu0 0
    %176 = vmatpush2.bf16.msra.mxu0 0
    %177 = vmatprep.subr.bf16.mxu0 0
    %178 = vmatpush2.bf16.msra.mxu0 0
    %179 = vmatprep.subr.bf16.mxu0 0
    %180 = vmatpush2.bf16.msra.mxu0 0
    %181 = vmatprep.subr.bf16.mxu0 0
    %182 = vmatpush2.bf16.msra.mxu0 0
    %183 = vmatprep.subr.bf16.mxu0 0
    %184 = vmatpush2.bf16.msra.mxu0 0
    %185 = vmatprep.subr.bf16.mxu0 0
    %186 = vmatpush2.bf16.msra.mxu0 0
    %187 = vmatprep.mubr.bf16.mxu0 0
    %188 = vmatmul.mubr.bf16.gmra.mxu0 %v86
    %v189 = vpop.f32.mrf.mxu0
    %v190 = vadd.f32 0.0, %v189
    %v191 = vpop.f32.mrf.mxu0
    %v192 = vadd.f32 0.0, %v191
    %v193 = vpop.f32.mrf.mxu0
    %v194 = vadd.f32 0.0, %v193
    %v195 = vpop.f32.mrf.mxu0
    %v196 = vadd.f32 0.0, %v195
    %197 = vdwg.mxu0
    %v198 = vxor.u32 %v123, 2147483648
    %v199 = vxor.u32 %v125, 2147483648
    %v200 = vxor.u32 %v127, 2147483648
    %v201 = vxor.u32 %v129, 2147483648
    %v202 = vmul.f32 %v198, 1.442695
    %v203 = vpow.pop %v202
    %v204 = vmul.f32 %v199, 1.442695
    %v205 = vpow.pop %v204
    %v206 = vmul.f32 %v200, 1.442695
    %v207 = vpow.pop %v206
    %v208 = vmul.f32 %v201, 1.442695
    %v209 = vpow.pop %v208
    %v210 = vadd.f32 %v203, 1.0
    %v211 = vadd.f32 %v205, 1.0
    %v212 = vadd.f32 %v207, 1.0
    %v213 = vadd.f32 %v209, 1.0
    %v214 = vrcp.pop %v210
    %v215 = vmul.f32 1.0, %v214
    %v216 = vrcp.pop %v211
    %v217 = vmul.f32 1.0, %v216
    %v218 = vrcp.pop %v212
    %v219 = vmul.f32 1.0, %v218
    %v220 = vrcp.pop %v213
    %v221 = vmul.f32 1.0, %v220
    %v222 = vmul.f32 %v123, %v215
    %v223 = vmul.f32 %v125, %v217
    %v224 = vmul.f32 %v127, %v219
    %v225 = vmul.f32 %v129, %v221
    %v226 = vmul.f32 %v222, %v190
    %v227 = vmul.f32 %v223, %v192
    %v228 = vmul.f32 %v224, %v194
    %v229 = vmul.f32 %v225, %v196
    %v230 = vld [vmem:[#allocation2] sm:$0xff]
    %v231 = vld [vmem:[#allocation2 + $0x8] sm:$0xff]
    %v232 = vpack.c.bf16 %v228, %v226
    %v233 = vpack.c.bf16 %v229, %v227
    %v234 = vld [vmem:[%s4] sm:$0xf]
    %v235 = vld [vmem:[%s4 + $0x4] sm:$0xf]
    %v236 = vld [vmem:[%s4 + $0x8] sm:$0xf]
    %v237 = vld [vmem:[%s4 + $0xc] sm:$0xf]
    %v238 = vld [vmem:[%s4 + $0x10] sm:$0xf]
    %v239 = vld [vmem:[%s4 + $0x14] sm:$0xf]
    %v240 = vld [vmem:[%s4 + $0x18] sm:$0xf]
    %v241 = vld [vmem:[%s4 + $0x1c] sm:$0xf]
    %v242 = vld [vmem:[%s4 + $0x20] sm:$0xf]
    %v243 = vld [vmem:[%s4 + $0x24] sm:$0xf]
    %v244 = vld [vmem:[%s4 + $0x28] sm:$0xf]
    %v245 = vld [vmem:[%s4 + $0x2c] sm:$0xf]
    %v246 = vld [vmem:[%s4 + $0x30] sm:$0xf]
    %v247 = vld [vmem:[%s4 + $0x34] sm:$0xf]
    %v248 = vld [vmem:[%s4 + $0x38] sm:$0xf]
    %v249 = vld [vmem:[%s4 + $0x3c] sm:$0xf]
    %v250 = vld [vmem:[%s4 + $0x40] sm:$0xf]
    %v251 = vld [vmem:[%s4 + $0x44] sm:$0xf]
    %v252 = vld [vmem:[%s4 + $0x48] sm:$0xf]
    %v253 = vld [vmem:[%s4 + $0x4c] sm:$0xf]
    %v254 = vld [vmem:[%s4 + $0x50] sm:$0xf]
    %v255 = vld [vmem:[%s4 + $0x54] sm:$0xf]
    %v256 = vld [vmem:[%s4 + $0x58] sm:$0xf]
    %v257 = vld [vmem:[%s4 + $0x5c] sm:$0xf]
    %v258 = vld [vmem:[%s4 + $0x60] sm:$0xf]
    %v259 = vld [vmem:[%s4 + $0x64] sm:$0xf]
    %v260 = vld [vmem:[%s4 + $0x68] sm:$0xf]
    %v261 = vld [vmem:[%s4 + $0x6c] sm:$0xf]
    %v262 = vld [vmem:[%s4 + $0x70] sm:$0xf]
    %v263 = vld [vmem:[%s4 + $0x74] sm:$0xf]
    %v264 = vld [vmem:[%s4 + $0x78] sm:$0xf]
    %v265 = vld [vmem:[%s4 + $0x7c] sm:$0xf]
    %v298 = vunpack.c.l.b16 %v234
    %v299 = vunpack.c.l.b16 %v235
    %v300 = vunpack.c.l.b16 %v236
    %v301 = vunpack.c.l.b16 %v237
    %v302 = vunpack.c.l.b16 %v238
    %v303 = vunpack.c.l.b16 %v239
    %v304 = vunpack.c.l.b16 %v240
    %v305 = vunpack.c.l.b16 %v241
    %v306 = vunpack.c.l.b16 %v242
    %v307 = vunpack.c.l.b16 %v243
    %v308 = vunpack.c.l.b16 %v244
    %v309 = vunpack.c.l.b16 %v245
    %v310 = vunpack.c.l.b16 %v246
    %v311 = vunpack.c.l.b16 %v247
    %v312 = vunpack.c.l.b16 %v248
    %v313 = vunpack.c.l.b16 %v249
    %v314 = vunpack.c.l.b16 %v250
    %v315 = vunpack.c.l.b16 %v251
    %v316 = vunpack.c.l.b16 %v252
    %v317 = vunpack.c.l.b16 %v253
    %v318 = vunpack.c.l.b16 %v254
    %v319 = vunpack.c.l.b16 %v255
    %v320 = vunpack.c.l.b16 %v256
    %v321 = vunpack.c.l.b16 %v257
    %v322 = vunpack.c.l.b16 %v258
    %v323 = vunpack.c.l.b16 %v259
    %v324 = vunpack.c.l.b16 %v260
    %v325 = vunpack.c.l.b16 %v261
    %v326 = vunpack.c.l.b16 %v262
    %v327 = vunpack.c.l.b16 %v263
    %v328 = vunpack.c.l.b16 %v264
    %v329 = vunpack.c.l.b16 %v265
    %v330 = vpack.c.b16 %v299, %v298
    %v331 = vpack.c.b16 %v301, %v300
    %v332 = vpack.c.b16 %v303, %v302
    %v333 = vpack.c.b16 %v305, %v304
    %v334 = vpack.c.b16 %v307, %v306
    %v335 = vpack.c.b16 %v309, %v308
    %v336 = vpack.c.b16 %v311, %v310
    %v337 = vpack.c.b16 %v313, %v312
    %v338 = vpack.c.b16 %v315, %v314
    %v339 = vpack.c.b16 %v317, %v316
    %v340 = vpack.c.b16 %v319, %v318
    %v341 = vpack.c.b16 %v321, %v320
    %v342 = vpack.c.b16 %v323, %v322
    %v343 = vpack.c.b16 %v325, %v324
    %v344 = vpack.c.b16 %v327, %v326
    %v345 = vpack.c.b16 %v329, %v328
    %362 = vmatprep.subr.bf16.mxu0 0
    %363 = vmatpush1.bf16.msra.mxu0 %v337
    %364 = vmatprep.subr.bf16.mxu0 0
    %365 = vmatpush1.bf16.msra.mxu0 %v336
    %366 = vmatprep.subr.bf16.mxu0 0
    %367 = vmatpush1.bf16.msra.mxu0 %v335
    %368 = vmatprep.subr.bf16.mxu0 0
    %369 = vmatpush1.bf16.msra.mxu0 %v334
    %370 = vmatprep.subr.bf16.mxu0 0
    %371 = vmatpush1.bf16.msra.mxu0 %v333
    %372 = vmatprep.subr.bf16.mxu0 0
    %373 = vmatpush1.bf16.msra.mxu0 %v332
    %374 = vmatprep.subr.bf16.mxu0 0
    %375 = vmatpush1.bf16.msra.mxu0 %v331
    %376 = vmatprep.subr.bf16.mxu0 0
    %377 = vmatpush1.bf16.msra.mxu0 %v330
    %378 = vmatprep.subr.bf16.mxu0 0
    %379 = vmatpush2.bf16.msra.mxu0 %v345
    %380 = vmatprep.subr.bf16.mxu0 0
    %381 = vmatpush2.bf16.msra.mxu0 %v344
    %382 = vmatprep.subr.bf16.mxu0 0
    %383 = vmatpush2.bf16.msra.mxu0 %v343
    %384 = vmatprep.subr.bf16.mxu0 0
    %385 = vmatpush2.bf16.msra.mxu0 %v342
    %386 = vmatprep.subr.bf16.mxu0 0
    %387 = vmatpush2.bf16.msra.mxu0 %v341
    %388 = vmatprep.subr.bf16.mxu0 0
    %389 = vmatpush2.bf16.msra.mxu0 %v340
    %390 = vmatprep.subr.bf16.mxu0 0
    %391 = vmatpush2.bf16.msra.mxu0 %v339
    %392 = vmatprep.subr.bf16.mxu0 0
    %393 = vmatpush2.bf16.msra.mxu0 %v338
    %394 = vmatprep.mubr.bf16.mxu0 %v233
    %395 = vmatmul.mubr.bf16.gmra.mxu0 %v232
    %v396 = vpop.f32.mrf.mxu0
    %v397 = vadd.f32 0.0, %v396
    %v398 = vpop.f32.mrf.mxu0
    %v399 = vpop.f32.mrf.mxu0
    %v400 = vadd.f32 0.0, %v399
    %v401 = vpop.f32.mrf.mxu0
    %402 = vdwg.mxu0
    %v403 = vadd.f32 %v230, %v397
    %v404 = vadd.f32 %v231, %v400
    %405 = vst.msk [vmem:[#allocation2] sm:$0xff] %vm35, %v403
    %406 = vst.msk [vmem:[#allocation2 + $0x8] sm:$0xff] %vm35, %v404
    // Predicated region
    $region26: #{block_forward.7} parent=1 // pred_check
      _
    $region27: #{block_forward.7} parent=1 // pred_check_branch
      %408 = sbr.rel (0) target = $region29
    $region28: #{block_forward.7} parent=1 // pred_region
      %s410 = ssub.s32 256, 256
      %411 = vsyncadd [#allocation3], %s410
      %s412 = sshll.u32 [#allocation2], 4
      %s413 = int_to_ptr.vmem [resolvable:$true] %s412
      %418 = dma.vmem_to_hbm [thread:$0]  %s413, 256, %s5, [#allocation3], 128, 128, 8
    $region29: #{block_forward.7} parent=1 // pred_fallthru
      _
    // Predicated region
    $region30: #{block_forward.7} parent=1 // pred_check
      _
    $region31: #{block_forward.7} parent=1 // pred_check_branch
      %420 = sbr.rel (0) target = $region33
    $region32: #{block_forward.7} parent=1 // pred_region
      %421 = dma.done [#allocation3], 256
    $region33: #{block_forward.7} parent=1 // pred_fallthru
      _
    %422 = vsyncpa [#allocation3], 1

</llo_original>
